<compile_context>
chip_gen: v5e
topology: v5e:2x2
jax: 0.10.0
libtpu: 0.0.40
codegen_flags: <defaults>
</compile_context>

<pallas_src>
import functools

import jax
import jax.numpy as jnp
from jax.experimental import pallas as pl
from jax.experimental.pallas import tpu as pltpu

EPS = 1e-8      # l2_norm epsilon
RS_EPS = 1e-8   # RSNorm variance epsilon


def _l2norm(x):
    return x * jax.lax.rsqrt(jnp.sum(x * x, axis=-1, keepdims=True) + EPS)


def _norm_rows(w):
    # l2-normalize each row (input-feature axis) of a (..., out, in) weight.
    return w * jax.lax.rsqrt(jnp.sum(w * w, axis=-1, keepdims=True) + EPS)


def _round_up(x, m):
    return ((x + m - 1) // m) * m


# ----------------------------------------------------------------------------
# Kernel
# ----------------------------------------------------------------------------
def simba_v2_kernel(
    x_ref, mean_ref, istd_ref,
    wembt_ref, s_emb_ref, w1t_ref, s1_ref, w2t_ref, alpha_ref, wheadst_ref,
    out_ref,
    xpad_ref,
    *, obs, hp, num_blocks, shift, matmul_dtype,
):
    f32 = jnp.float32
    tb = x_ref.shape[0]

    # --- RSNorm (eval statistics) on the raw, unpadded obs lanes
    xn = (x_ref[...].astype(f32) - mean_ref[...]) * istd_ref[...]      # (TB, obs)

    # --- synthesize lane-dense x_shifted = [xn | shift | zeros] in VMEM scratch
    xpad_ref[...] = jnp.zeros(xpad_ref.shape, f32)
    xpad_ref[:, :obs] = xn                                    # masked lane store
    xpad_ref[:, obs:obs + 1] = jnp.full((tb, 1), shift, f32)  # shift column
    x_tilde = _l2norm(xpad_ref[...])          # zero pad lanes contribute nothing

    # --- embedding (Scaler applied in f32 after the MXU -> bf16-safe)
    h = _l2norm(
        jnp.dot(x_tilde.astype(matmul_dtype), wembt_ref[...],
                preferred_element_type=f32) * s_emb_ref[...])

    # --- SimbaV2 residual blocks
    def block_compute(h, w1t, w2t, s1, alpha):
        u = jnp.maximum(
            jnp.dot(h.astype(matmul_dtype), w1t, preferred_element_type=f32) * s1,
            0.0)
        v = _l2norm(
            jnp.dot(u.astype(matmul_dtype), w2t, preferred_element_type=f32))
        return _l2norm(h + alpha * (v - h))                  # hyperspherical LERP

    if num_blocks <= 4 and tb < 256:
        # small tiles / short stacks: static unroll keeps LLO scheduling visibility
        for b in range(num_blocks):
            h = block_compute(h, w1t_ref[b], w2t_ref[b],
                              s1_ref[b:b + 1, :], alpha_ref[b:b + 1, :])
    else:
        # big tiles / deep stacks: unrolled fori bounds vreg live ranges
        def body(b, h):
            return block_compute(h, w1t_ref[b], w2t_ref[b],
                                 s1_ref[pl.ds(b, 1), :], alpha_ref[pl.ds(b, 1), :])
        h = jax.lax.fori_loop(0, num_blocks, body, h, unroll=True)

    # --- single lane-dense output slab: [ features | actor | critic ]
    out_ref[:, :hp] = h.astype(out_ref.dtype)
    out_ref[:, hp:] = jnp.dot(h.astype(matmul_dtype), wheadst_ref[...],
                              preferred_element_type=f32).astype(out_ref.dtype)


# ----------------------------------------------------------------------------
# One-time (cacheable) weight preprocessing
# ----------------------------------------------------------------------------
def prepare_params(params, *, matmul_dtype=jnp.bfloat16):
    """Hoisted weight prep: call once per params update, reuse for every forward.

    Row-l2-normalizes every OrthogonalLinear weight, transposes to (in, out)
    layout, zero-pads feature dims to multiples of 128 lanes, and casts MXU
    operands to `matmul_dtype`.  Scalers (s_emb, s1), alpha and RSNorm stats
    stay in f32 and are applied after the MXU inside the kernel.
    """
    dt = jnp.float32
    obs = params["rs_mean"].shape[0]
    hidden = params["w_emb"].shape[0]
    nb, h4, _ = params["w1"].shape
    act = params["w_actor"].shape[0]
    d1 = obs + 1

    obsp = _round_up(d1, 128)
    hp = _round_up(hidden, 128)
    h4p = _round_up(h4, 128)
    hdp = _round_up(act + 1, 128)

    def pad2(a, r, c):
        return jnp.pad(a, ((0, r - a.shape[0]), (0, c - a.shape[1])))

    wembt = pad2(_norm_rows(params["w_emb"]).astype(dt).T, obsp, hp)        # (D1p,Hp)
    w1t = jnp.transpose(_norm_rows(params["w1"]).astype(dt), (0, 2, 1))     # (nb,H,4H)
    w1t = jnp.pad(w1t, ((0, 0), (0, hp - hidden), (0, h4p - h4)))
    w2t = jnp.transpose(_norm_rows(params["w2"]).astype(dt), (0, 2, 1))     # (nb,4H,H)
    w2t = jnp.pad(w2t, ((0, 0), (0, h4p - h4), (0, hp - hidden)))
    w_heads = jnp.concatenate([params["w_actor"], params["w_critic"]], axis=0)
    wheadst = pad2(_norm_rows(w_heads).astype(dt).T, hp, hdp)               # (Hp,HDp)

    return {
        "mean": params["rs_mean"].astype(dt)[None, :],
        "istd": jax.lax.rsqrt(params["rs_var"].astype(dt) + RS_EPS)[None, :],
        "wembt": wembt.astype(matmul_dtype),
        "s_emb": jnp.pad(params["s_emb"].astype(dt), (0, hp - hidden))[None, :],
        "w1t": w1t.astype(matmul_dtype),
        "s1": jnp.pad(params["s1"].astype(dt), ((0, 0), (0, h4p - h4))),
        "w2t": w2t.astype(matmul_dtype),
        "alpha": jnp.pad(params["alpha"].astype(dt), ((0, 0), (0, hp - hidden))),
        "wheadst": wheadst.astype(matmul_dtype),
        "dims": dict(obs=obs, hidden=hidden, h4=h4, num_blocks=nb, actor=act,
                     obsp=obsp, hp=hp, h4p=h4p, hdp=hdp),
    }


# ----------------------------------------------------------------------------
# Forward wrapper (hot path): tiny optional batch pad + one pallas_call + slices
# ----------------------------------------------------------------------------
def simba_v2_forward(x, prep, *, shift_constant=3.0, batch_tile=256,
                     out_dtype=jnp.float32):
    d = prep["dims"]
    obs, hidden, nb, act = d["obs"], d["hidden"], d["num_blocks"], d["actor"]
    obsp, hp, h4p, hdp = d["obsp"], d["hp"], d["h4p"], d["hdp"]
    matmul_dtype = prep["wembt"].dtype

    B = x.shape[0]
    assert x.shape[1] == obs

    # Batch tile: as large as possible (fewer ~0.35us grid steps, better MXU M
    # fill) but capped at ceil(B/2) so the "parallel" grid has >= 2 steps and
    # both v7x TensorCores get work; always a multiple of 8.
    tb = max(8, min(_round_up(batch_tile, 8), _round_up((B + 1) // 2, 8)))
    b_pad = _round_up(B, tb)
    if b_pad != B:
        x = jnp.pad(x, ((0, b_pad - B), (0, 0)))   # zero rows, sliced off below

    grid = (b_pad // tb,)

    def bcast(shape):
        return pl.BlockSpec(shape, lambda i, _n=len(shape): (0,) * _n)

    kernel = functools.partial(
        simba_v2_kernel, obs=obs, hp=hp, num_blocks=nb,
        shift=float(shift_constant), matmul_dtype=matmul_dtype)

    wbytes = sum(int(prep[k].size) * prep[k].dtype.itemsize
                 for k in ("wembt", "s_emb", "w1t", "s1", "w2t", "alpha",
                           "wheadst", "mean", "istd"))
    cost = pl.CostEstimate(
        flops=int(2 * b_pad * (obsp * hp + nb * 2 * hp * h4p + hp * hdp)),
        transcendentals=int(b_pad * (2 + 2 * nb)),
        bytes_accessed=int(x.size) * x.dtype.itemsize + wbytes
        + int(b_pad * (hp + hdp)) * jnp.dtype(out_dtype).itemsize,
    )

    slab = pl.pallas_call(
        kernel,
        out_shape=jax.ShapeDtypeStruct((b_pad, hp + hdp), out_dtype),
        grid=grid,
        in_specs=[
            pl.BlockSpec((tb, obs), lambda i: (i, 0)),   # raw obs (batch-tiled)
            bcast((1, obs)),        # RSNorm mean
            bcast((1, obs)),        # RSNorm inv-std
            bcast((obsp, hp)),      # embedding W^T (row-l2-normalized, padded)
            bcast((1, hp)),         # embedding scaler (f32, post-MXU)
            bcast((nb, hp, h4p)),   # block W1^T
            bcast((nb, h4p)),       # block scaler s1 (f32, post-MXU)
            bcast((nb, h4p, hp)),   # block W2^T
            bcast((nb, hp)),        # block alpha (LERP)
            bcast((hp, hdp)),       # fused [actor|critic] W^T
        ],
        out_specs=pl.BlockSpec((tb, hp + hdp), lambda i: (i, 0)),
        scratch_shapes=[pltpu.VMEM((tb, obsp), jnp.float32)],
        compiler_params=pltpu.CompilerParams(
            dimension_semantics=("parallel",),
            vmem_limit_bytes=64 * 1024 * 1024),
        cost_estimate=cost,
    )(x, prep["mean"], prep["istd"], prep["wembt"], prep["s_emb"], prep["w1t"],
      prep["s1"], prep["w2t"], prep["alpha"], prep["wheadst"])

    return {
        "actor_out": slab[:B, hp:hp + act],
        "critic_out": slab[:B, hp + act:hp + act + 1],
        "features": slab[:B, :hidden],
    }


# ----------------------------------------------------------------------------
# Parameter init + pure-JAX reference
# ----------------------------------------------------------------------------
def init_params(key, obs_shape, action_shape, hidden_dim, num_blocks):
    d1 = obs_shape + 1
    h = hidden_dim
    ortho = jax.nn.initializers.orthogonal()
    ks = jax.random.split(key, 4 + 2 * num_blocks)
    w1 = jnp.stack([ortho(ks[4 + 2 * i], (4 * h, h), jnp.float32)
                    for i in range(num_blocks)])
    w2 = jnp.stack([ortho(ks[5 + 2 * i], (h, 4 * h), jnp.float32)
                    for i in range(num_blocks)])
    return dict(
        rs_mean=jnp.zeros((obs_shape,), jnp.float32),
        rs_var=jnp.ones((obs_shape,), jnp.float32),
        w_emb=ortho(ks[0], (h, d1), jnp.float32),
        s_emb=jnp.ones((h,), jnp.float32),
        w1=w1,
        s1=jnp.ones((num_blocks, 4 * h), jnp.float32),
        w2=w2,
        alpha=jnp.full((num_blocks, h), 0.5, jnp.float32),
        w_actor=ortho(ks[1], (action_shape, h), jnp.float32),
        w_critic=ortho(ks[2], (1, h), jnp.float32),
    )


def simba_v2_reference(x, params, *, shift_constant=3.0):
    B = x.shape[0]
    xn = (x - params["rs_mean"]) * jax.lax.rsqrt(params["rs_var"] + RS_EPS)
    xs = jnp.concatenate([xn, jnp.full((B, 1), shift_constant, x.dtype)], -1)
    xt = _l2norm(xs)
    h = _l2norm(xt @ _norm_rows(params["w_emb"]).T * params["s_emb"])
    for b in range(params["w1"].shape[0]):
        u = jnp.maximum(h @ _norm_rows(params["w1"][b]).T * params["s1"][b], 0.0)
        v = _l2norm(u @ _norm_rows(params["w2"][b]).T)
        h = _l2norm(h + params["alpha"][b] * (v - h))
    return {
        "actor_out": h @ _norm_rows(params["w_actor"]).T,
        "critic_out": h @ _norm_rows(params["w_critic"]).T,
        "features": h,
    }


if __name__ == "__main__":
    obs_shape = 15
    action_shape = 6
    hidden_dim = 32
    num_blocks = 2

    key = jax.random.PRNGKey(0)
    kx, kx2, kp = jax.random.split(key, 3)
    params = init_params(kp, obs_shape, action_shape, hidden_dim, num_blocks)

    x = jax.random.normal(kx, (256, obs_shape), jnp.float32)
    ref = simba_v2_reference(x, params)

    # --- exact-math path: f32 MXU inputs, tight tolerance ---------------------
    prep_f32 = prepare_params(params, matmul_dtype=jnp.float32)   # cached once
    out = simba_v2_forward(x, prep_f32)
    jax.block_until_ready(out)
    for k in ("actor_out", "critic_out", "features"):
        assert out[k].shape == ref[k].shape, (k, out[k].shape, ref[k].shape)
        assert jnp.allclose(out[k], ref[k], atol=1e-5, rtol=1e-5), k

    # --- ragged small batch (exercises batch padding / slicing path) ----------
    x_small = jax.random.normal(kx2, (5, obs_shape), jnp.float32)
    out_s = simba_v2_forward(x_small, prep_f32)
    jax.block_until_ready(out_s)
    ref_s = simba_v2_reference(x_small, params)
    for k in ("actor_out", "critic_out", "features"):
        assert out_s[k].shape == ref_s[k].shape
        assert jnp.allclose(out_s[k], ref_s[k], atol=1e-5, rtol=1e-5), k

    # --- default path: bf16 MXU inputs, f32 accumulation (loose tolerance) ----
    prep_bf16 = prepare_params(params)                            # cached once
    out_bf = simba_v2_forward(x, prep_bf16)
    jax.block_until_ready(out_bf)
    for k in ("actor_out", "critic_out", "features"):
        assert jnp.allclose(out_bf[k], ref[k], atol=3e-2, rtol=3e-2), k

    # --- bf16 output slab (halves writeback) -----------------------------------
    out_bo = simba_v2_forward(x, prep_bf16, out_dtype=jnp.bfloat16)
    jax.block_until_ready(out_bo)
    assert out_bo["features"].dtype == jnp.bfloat16
    for k in ("actor_out", "critic_out", "features"):
        assert jnp.allclose(out_bo[k].astype(jnp.float32), ref[k],
                            atol=3e-2, rtol=3e-2), k

    print("KERNEL_OK")
</pallas_src>

<mosaic_0001>
module attributes {stable_mosaic.version = 11 : i64} {
  func.func @simba_v2_kernel(%arg0: i32, %arg1: memref<128x15xf32, #tpu.memory_space<vmem>>, %arg2: memref<1x15xf32, #tpu.memory_space<vmem>>, %arg3: memref<1x15xf32, #tpu.memory_space<vmem>>, %arg4: memref<128x128xf32, #tpu.memory_space<vmem>>, %arg5: memref<1x128xf32, #tpu.memory_space<vmem>>, %arg6: memref<2x128x128xf32, #tpu.memory_space<vmem>>, %arg7: memref<2x128xf32, #tpu.memory_space<vmem>>, %arg8: memref<2x128x128xf32, #tpu.memory_space<vmem>>, %arg9: memref<2x128xf32, #tpu.memory_space<vmem>>, %arg10: memref<128x128xf32, #tpu.memory_space<vmem>>, %arg11: memref<128x256xf32, #tpu.memory_space<vmem>>, %arg12: memref<128x128xf32, #tpu.memory_space<vmem>>) attributes {dimension_semantics = [#tpu.dimension_semantics<parallel>], iteration_bounds = array<i64: 2>, scalar_prefetch = 0 : i64, scratch_operands = 1 : i64, tpu.core_type = #tpu.core_type<tc>, window_params = [{transform_indices = @transform_0, window_bounds = array<i64: 128, 15>}, {pipeline_mode = #tpu.pipeline_mode<synchronous>, transform_indices = @transform_1, window_bounds = array<i64: 1, 15>}, {pipeline_mode = #tpu.pipeline_mode<synchronous>, transform_indices = @transform_2, window_bounds = array<i64: 1, 15>}, {pipeline_mode = #tpu.pipeline_mode<synchronous>, transform_indices = @transform_3, window_bounds = array<i64: 128, 128>}, {pipeline_mode = #tpu.pipeline_mode<synchronous>, transform_indices = @transform_4, window_bounds = array<i64: 1, 128>}, {pipeline_mode = #tpu.pipeline_mode<synchronous>, transform_indices = @transform_5, window_bounds = array<i64: 2, 128, 128>}, {pipeline_mode = #tpu.pipeline_mode<synchronous>, transform_indices = @transform_6, window_bounds = array<i64: 2, 128>}, {pipeline_mode = #tpu.pipeline_mode<synchronous>, transform_indices = @transform_7, window_bounds = array<i64: 2, 128, 128>}, {pipeline_mode = #tpu.pipeline_mode<synchronous>, transform_indices = @transform_8, window_bounds = array<i64: 2, 128>}, {pipeline_mode = #tpu.pipeline_mode<synchronous>, transform_indices = @transform_9, window_bounds = array<i64: 128, 128>}, {transform_indices = @transform_10, window_bounds = array<i64: 128, 256>}]} {
    %c0 = arith.constant 0 : index
    %c0_0 = arith.constant 0 : index
    %0 = vector.load %arg1[%c0, %c0_0] : memref<128x15xf32, #tpu.memory_space<vmem>>, vector<128x15xf32>
    %c0_1 = arith.constant 0 : index
    %c0_2 = arith.constant 0 : index
    %1 = vector.load %arg2[%c0_1, %c0_2] : memref<1x15xf32, #tpu.memory_space<vmem>>, vector<1x15xf32>
    %2 = vector.broadcast %1 : vector<1x15xf32> to vector<128x15xf32>
    %3 = arith.subf %0, %2 : vector<128x15xf32>
    %c0_3 = arith.constant 0 : index
    %c0_4 = arith.constant 0 : index
    %4 = vector.load %arg3[%c0_3, %c0_4] : memref<1x15xf32, #tpu.memory_space<vmem>>, vector<1x15xf32>
    %5 = vector.broadcast %4 : vector<1x15xf32> to vector<128x15xf32>
    %6 = arith.mulf %3, %5 : vector<128x15xf32>
    %cst = arith.constant 0.000000e+00 : f32
    %7 = vector.broadcast %cst : f32 to vector<128x128xf32>
    %c0_5 = arith.constant 0 : index
    %c0_6 = arith.constant 0 : index
    %8 = vector.load %arg12[%c0_5, %c0_6] : memref<128x128xf32, #tpu.memory_space<vmem>>, vector<128x128xf32>
    tpu.vector_store %arg12[%c0_5, %c0_6], %7 {strides = array<i32>} : memref<128x128xf32, #tpu.memory_space<vmem>>, vector<128x128xf32>,
    %c0_7 = arith.constant 0 : index
    %c0_8 = arith.constant 0 : index
    %9 = vector.load %arg12[%c0_7, %c0_8] : memref<128x128xf32, #tpu.memory_space<vmem>>, vector<128x15xf32>
    tpu.vector_store %arg12[%c0_7, %c0_8], %6 {strides = array<i32>} : memref<128x128xf32, #tpu.memory_space<vmem>>, vector<128x15xf32>,
    %cst_9 = arith.constant 3.000000e+00 : f32
    %10 = vector.broadcast %cst_9 : f32 to vector<128x1xf32>
    %c0_10 = arith.constant 0 : index
    %c15 = arith.constant 15 : index
    %11 = vector.load %arg12[%c0_10, %c15] : memref<128x128xf32, #tpu.memory_space<vmem>>, vector<128x1xf32>
    tpu.vector_store %arg12[%c0_10, %c15], %10 {strides = array<i32>} : memref<128x128xf32, #tpu.memory_space<vmem>>, vector<128x1xf32>,
    %c0_11 = arith.constant 0 : index
    %c0_12 = arith.constant 0 : index
    %12 = vector.load %arg12[%c0_11, %c0_12] : memref<128x128xf32, #tpu.memory_space<vmem>>, vector<128x128xf32>
    %13 = arith.mulf %12, %12 : vector<128x128xf32>
    %cst_13 = arith.constant dense<0.000000e+00> : vector<128xf32>
    %14 = vector.multi_reduction <add>, %13, %cst_13 [1] : vector<128x128xf32> to vector<128xf32>
    %15 = vector.shape_cast %14 : vector<128xf32> to vector<128x1xf32>
    %cst_14 = arith.constant 9.99999993E-9 : f32
    %16 = vector.broadcast %cst_14 : f32 to vector<128x1xf32>
    %17 = arith.addf %15, %16 : vector<128x1xf32>
    %18 = math.rsqrt %17 : vector<128x1xf32>
    %19 = vector.broadcast %18 : vector<128x1xf32> to vector<128x128xf32>
    %20 = arith.mulf %12, %19 : vector<128x128xf32>
    %c0_15 = arith.constant 0 : index
    %c0_16 = arith.constant 0 : index
    %21 = vector.load %arg4[%c0_15, %c0_16] : memref<128x128xf32, #tpu.memory_space<vmem>>, vector<128x128xf32>
    %cst_17 = arith.constant dense<0.000000e+00> : vector<128x128xf32>
    %22 = tpu.matmul %20, %21, %cst_17 {dimension_numbers = #tpu.dot_dimension_numbers<[1], [0], [0], [1], [0, 0, 1, 1], [], []>} : vector<128x128xf32>, vector<128x128xf32>, vector<128x128xf32> -> vector<128x128xf32>
    %c0_18 = arith.constant 0 : index
    %c0_19 = arith.constant 0 : index
    %23 = vector.load %arg5[%c0_18, %c0_19] : memref<1x128xf32, #tpu.memory_space<vmem>>, vector<1x128xf32>
    %24 = vector.broadcast %23 : vector<1x128xf32> to vector<128x128xf32>
    %25 = arith.mulf %22, %24 : vector<128x128xf32>
    %26 = arith.mulf %25, %25 : vector<128x128xf32>
    %cst_20 = arith.constant dense<0.000000e+00> : vector<128xf32>
    %27 = vector.multi_reduction <add>, %26, %cst_20 [1] : vector<128x128xf32> to vector<128xf32>
    %28 = vector.shape_cast %27 : vector<128xf32> to vector<128x1xf32>
    %cst_21 = arith.constant 9.99999993E-9 : f32
    %29 = vector.broadcast %cst_21 : f32 to vector<128x1xf32>
    %30 = arith.addf %28, %29 : vector<128x1xf32>
    %31 = math.rsqrt %30 : vector<128x1xf32>
    %32 = vector.broadcast %31 : vector<128x1xf32> to vector<128x128xf32>
    %33 = arith.mulf %25, %32 : vector<128x128xf32>
    %c0_22 = arith.constant 0 : index
    %c0_23 = arith.constant 0 : index
    %c0_24 = arith.constant 0 : index
    %34 = vector.load %arg6[%c0_22, %c0_23, %c0_24] : memref<2x128x128xf32, #tpu.memory_space<vmem>>, vector<1x128x128xf32>
    %35 = vector.shape_cast %34 : vector<1x128x128xf32> to vector<128x128xf32>
    %c0_25 = arith.constant 0 : index
    %c0_26 = arith.constant 0 : index
    %c0_27 = arith.constant 0 : index
    %36 = vector.load %arg8[%c0_25, %c0_26, %c0_27] : memref<2x128x128xf32, #tpu.memory_space<vmem>>, vector<1x128x128xf32>
    %37 = vector.shape_cast %36 : vector<1x128x128xf32> to vector<128x128xf32>
    %c0_28 = arith.constant 0 : index
    %c0_29 = arith.constant 0 : index
    %38 = vector.load %arg7[%c0_28, %c0_29] : memref<2x128xf32, #tpu.memory_space<vmem>>, vector<1x128xf32>
    %c0_30 = arith.constant 0 : index
    %c0_31 = arith.constant 0 : index
    %39 = vector.load %arg9[%c0_30, %c0_31] : memref<2x128xf32, #tpu.memory_space<vmem>>, vector<1x128xf32>
    %cst_32 = arith.constant dense<0.000000e+00> : vector<128x128xf32>
    %40 = tpu.matmul %33, %35, %cst_32 {dimension_numbers = #tpu.dot_dimension_numbers<[1], [0], [0], [1], [0, 0, 1, 1], [], []>} : vector<128x128xf32>, vector<128x128xf32>, vector<128x128xf32> -> vector<128x128xf32>
    %41 = vector.broadcast %38 : vector<1x128xf32> to vector<128x128xf32>
    %42 = arith.mulf %40, %41 : vector<128x128xf32>
    %cst_33 = arith.constant 0.000000e+00 : f32
    %43 = vector.broadcast %cst_33 : f32 to vector<128x128xf32>
    %44 = arith.maximumf %42, %43 : vector<128x128xf32>
    %cst_34 = arith.constant dense<0.000000e+00> : vector<128x128xf32>
    %45 = tpu.matmul %44, %37, %cst_34 {dimension_numbers = #tpu.dot_dimension_numbers<[1], [0], [0], [1], [0, 0, 1, 1], [], []>} : vector<128x128xf32>, vector<128x128xf32>, vector<128x128xf32> -> vector<128x128xf32>
    %46 = arith.mulf %45, %45 : vector<128x128xf32>
    %cst_35 = arith.constant dense<0.000000e+00> : vector<128xf32>
    %47 = vector.multi_reduction <add>, %46, %cst_35 [1] : vector<128x128xf32> to vector<128xf32>
    %48 = vector.shape_cast %47 : vector<128xf32> to vector<128x1xf32>
    %cst_36 = arith.constant 9.99999993E-9 : f32
    %49 = vector.broadcast %cst_36 : f32 to vector<128x1xf32>
    %50 = arith.addf %48, %49 : vector<128x1xf32>
    %51 = math.rsqrt %50 : vector<128x1xf32>
    %52 = vector.broadcast %51 : vector<128x1xf32> to vector<128x128xf32>
    %53 = arith.mulf %45, %52 : vector<128x128xf32>
    %54 = arith.subf %53, %33 : vector<128x128xf32>
    %55 = vector.broadcast %39 : vector<1x128xf32> to vector<128x128xf32>
    %56 = arith.mulf %55, %54 : vector<128x128xf32>
    %57 = arith.addf %33, %56 : vector<128x128xf32>
    %58 = arith.mulf %57, %57 : vector<128x128xf32>
    %cst_37 = arith.constant dense<0.000000e+00> : vector<128xf32>
    %59 = vector.multi_reduction <add>, %58, %cst_37 [1] : vector<128x128xf32> to vector<128xf32>
    %60 = vector.shape_cast %59 : vector<128xf32> to vector<128x1xf32>
    %cst_38 = arith.constant 9.99999993E-9 : f32
    %61 = vector.broadcast %cst_38 : f32 to vector<128x1xf32>
    %62 = arith.addf %60, %61 : vector<128x1xf32>
    %63 = math.rsqrt %62 : vector<128x1xf32>
    %64 = vector.broadcast %63 : vector<128x1xf32> to vector<128x128xf32>
    %65 = arith.mulf %57, %64 : vector<128x128xf32>
    %c1 = arith.constant 1 : index
    %c0_39 = arith.constant 0 : index
    %c0_40 = arith.constant 0 : index
    %66 = vector.load %arg6[%c1, %c0_39, %c0_40] : memref<2x128x128xf32, #tpu.memory_space<vmem>>, vector<1x128x128xf32>
    %67 = vector.shape_cast %66 : vector<1x128x128xf32> to vector<128x128xf32>
    %c1_41 = arith.constant 1 : index
    %c0_42 = arith.constant 0 : index
    %c0_43 = arith.constant 0 : index
    %68 = vector.load %arg8[%c1_41, %c0_42, %c0_43] : memref<2x128x128xf32, #tpu.memory_space<vmem>>, vector<1x128x128xf32>
    %69 = vector.shape_cast %68 : vector<1x128x128xf32> to vector<128x128xf32>
    %c1_44 = arith.constant 1 : index
    %c0_45 = arith.constant 0 : index
    %70 = vector.load %arg7[%c1_44, %c0_45] : memref<2x128xf32, #tpu.memory_space<vmem>>, vector<1x128xf32>
    %c1_46 = arith.constant 1 : index
    %c0_47 = arith.constant 0 : index
    %71 = vector.load %arg9[%c1_46, %c0_47] : memref<2x128xf32, #tpu.memory_space<vmem>>, vector<1x128xf32>
    %cst_48 = arith.constant dense<0.000000e+00> : vector<128x128xf32>
    %72 = tpu.matmul %65, %67, %cst_48 {dimension_numbers = #tpu.dot_dimension_numbers<[1], [0], [0], [1], [0, 0, 1, 1], [], []>} : vector<128x128xf32>, vector<128x128xf32>, vector<128x128xf32> -> vector<128x128xf32>
    %73 = vector.broadcast %70 : vector<1x128xf32> to vector<128x128xf32>
    %74 = arith.mulf %72, %73 : vector<128x128xf32>
    %cst_49 = arith.constant 0.000000e+00 : f32
    %75 = vector.broadcast %cst_49 : f32 to vector<128x128xf32>
    %76 = arith.maximumf %74, %75 : vector<128x128xf32>
    %cst_50 = arith.constant dense<0.000000e+00> : vector<128x128xf32>
    %77 = tpu.matmul %76, %69, %cst_50 {dimension_numbers = #tpu.dot_dimension_numbers<[1], [0], [0], [1], [0, 0, 1, 1], [], []>} : vector<128x128xf32>, vector<128x128xf32>, vector<128x128xf32> -> vector<128x128xf32>
    %78 = arith.mulf %77, %77 : vector<128x128xf32>
    %cst_51 = arith.constant dense<0.000000e+00> : vector<128xf32>
    %79 = vector.multi_reduction <add>, %78, %cst_51 [1] : vector<128x128xf32> to vector<128xf32>
    %80 = vector.shape_cast %79 : vector<128xf32> to vector<128x1xf32>
    %cst_52 = arith.constant 9.99999993E-9 : f32
    %81 = vector.broadcast %cst_52 : f32 to vector<128x1xf32>
    %82 = arith.addf %80, %81 : vector<128x1xf32>
    %83 = math.rsqrt %82 : vector<128x1xf32>
    %84 = vector.broadcast %83 : vector<128x1xf32> to vector<128x128xf32>
    %85 = arith.mulf %77, %84 : vector<128x128xf32>
    %86 = arith.subf %85, %65 : vector<128x128xf32>
    %87 = vector.broadcast %71 : vector<1x128xf32> to vector<128x128xf32>
    %88 = arith.mulf %87, %86 : vector<128x128xf32>
    %89 = arith.addf %65, %88 : vector<128x128xf32>
    %90 = arith.mulf %89, %89 : vector<128x128xf32>
    %cst_53 = arith.constant dense<0.000000e+00> : vector<128xf32>
    %91 = vector.multi_reduction <add>, %90, %cst_53 [1] : vector<128x128xf32> to vector<128xf32>
    %92 = vector.shape_cast %91 : vector<128xf32> to vector<128x1xf32>
    %cst_54 = arith.constant 9.99999993E-9 : f32
    %93 = vector.broadcast %cst_54 : f32 to vector<128x1xf32>
    %94 = arith.addf %92, %93 : vector<128x1xf32>
    %95 = math.rsqrt %94 : vector<128x1xf32>
    %96 = vector.broadcast %95 : vector<128x1xf32> to vector<128x128xf32>
    %97 = arith.mulf %89, %96 : vector<128x128xf32>
    %c0_55 = arith.constant 0 : index
    %c0_56 = arith.constant 0 : index
    %98 = vector.load %arg11[%c0_55, %c0_56] : memref<128x256xf32, #tpu.memory_space<vmem>>, vector<128x128xf32>
    tpu.vector_store %arg11[%c0_55, %c0_56], %97 {strides = array<i32>} : memref<128x256xf32, #tpu.memory_space<vmem>>, vector<128x128xf32>,
    %c0_57 = arith.constant 0 : index
    %c0_58 = arith.constant 0 : index
    %99 = vector.load %arg10[%c0_57, %c0_58] : memref<128x128xf32, #tpu.memory_space<vmem>>, vector<128x128xf32>
    %cst_59 = arith.constant dense<0.000000e+00> : vector<128x128xf32>
    %100 = tpu.matmul %97, %99, %cst_59 {dimension_numbers = #tpu.dot_dimension_numbers<[1], [0], [0], [1], [0, 0, 1, 1], [], []>} : vector<128x128xf32>, vector<128x128xf32>, vector<128x128xf32> -> vector<128x128xf32>
    %c0_60 = arith.constant 0 : index
    %c128 = arith.constant 128 : index
    %101 = vector.load %arg11[%c0_60, %c128] : memref<128x256xf32, #tpu.memory_space<vmem>>, vector<128x128xf32>
    tpu.vector_store %arg11[%c0_60, %c128], %100 {strides = array<i32>} : memref<128x256xf32, #tpu.memory_space<vmem>>, vector<128x128xf32>,
    return
  }
  func.func @transform_0(%arg0: i32) -> (i32, i32) {
    %c0_i32 = arith.constant 0 : i32
    %c0_i32_0 = arith.constant 0 : i32
    return %arg0, %c0_i32 : i32, i32
  }
  func.func @transform_1(%arg0: i32) -> (i32, i32) {
    %c0_i32 = arith.constant 0 : i32
    %c0_i32_0 = arith.constant 0 : i32
    %c0_i32_1 = arith.constant 0 : i32
    return %c0_i32, %c0_i32_0 : i32, i32
  }
  func.func @transform_2(%arg0: i32) -> (i32, i32) {
    %c0_i32 = arith.constant 0 : i32
    %c0_i32_0 = arith.constant 0 : i32
    %c0_i32_1 = arith.constant 0 : i32
    return %c0_i32, %c0_i32_0 : i32, i32
  }
  func.func @transform_3(%arg0: i32) -> (i32, i32) {
    %c0_i32 = arith.constant 0 : i32
    %c0_i32_0 = arith.constant 0 : i32
    %c0_i32_1 = arith.constant 0 : i32
    return %c0_i32, %c0_i32_0 : i32, i32
  }
  func.func @transform_4(%arg0: i32) -> (i32, i32) {
    %c0_i32 = arith.constant 0 : i32
    %c0_i32_0 = arith.constant 0 : i32
    %c0_i32_1 = arith.constant 0 : i32
    return %c0_i32, %c0_i32_0 : i32, i32
  }
  func.func @transform_5(%arg0: i32) -> (i32, i32, i32) {
    %c0_i32 = arith.constant 0 : i32
    %c0_i32_0 = arith.constant 0 : i32
    %c0_i32_1 = arith.constant 0 : i32
    %c0_i32_2 = arith.constant 0 : i32
    return %c0_i32, %c0_i32_0, %c0_i32_1 : i32, i32, i32
  }
  func.func @transform_6(%arg0: i32) -> (i32, i32) {
    %c0_i32 = arith.constant 0 : i32
    %c0_i32_0 = arith.constant 0 : i32
    %c0_i32_1 = arith.constant 0 : i32
    return %c0_i32, %c0_i32_0 : i32, i32
  }
  func.func @transform_7(%arg0: i32) -> (i32, i32, i32) {
    %c0_i32 = arith.constant 0 : i32
    %c0_i32_0 = arith.constant 0 : i32
    %c0_i32_1 = arith.constant 0 : i32
    %c0_i32_2 = arith.constant 0 : i32
    return %c0_i32, %c0_i32_0, %c0_i32_1 : i32, i32, i32
  }
  func.func @transform_8(%arg0: i32) -> (i32, i32) {
    %c0_i32 = arith.constant 0 : i32
    %c0_i32_0 = arith.constant 0 : i32
    %c0_i32_1 = arith.constant 0 : i32
    return %c0_i32, %c0_i32_0 : i32, i32
  }
  func.func @transform_9(%arg0: i32) -> (i32, i32) {
    %c0_i32 = arith.constant 0 : i32
    %c0_i32_0 = arith.constant 0 : i32
    %c0_i32_1 = arith.constant 0 : i32
    return %c0_i32, %c0_i32_0 : i32, i32
  }
  func.func @transform_10(%arg0: i32) -> (i32, i32) {
    %c0_i32 = arith.constant 0 : i32
    %c0_i32_0 = arith.constant 0 : i32
    return %arg0, %c0_i32 : i32, i32
  }
}

</mosaic_0001>

<llo_original>
// kernel: tpu_custom_call.1
$region0: #{tpu_custom_call.1}
  #allocation0 [shape = 'u32[]', space=smem, size = 0x4, offset = 0x4, fixed_abs, tag = 'smem constant byte address 0x4 - core index']
  #allocation1 [shape = 'u32[72,128]{1,0:T(1,128)}', space=vmem, size = 0x9000, scoped, tag = 'internal scratch']
  #allocation2 [shape = 'f32[128,128]{1,0:T(8,128)}', space=vmem, size = 0x10000, scoped, tag = 'scratch operand']
  %s0 = inlined_call_operand.vmem [shape: f32[256,15], index: 0, kind: input, shape index: {}]
  %s1 = inlined_call_operand.vmem [shape: f32[1,15], index: 1, kind: input, shape index: {}]
  %s2 = inlined_call_operand.vmem [shape: f32[1,15], index: 2, kind: input, shape index: {}]
  %s3 = inlined_call_operand.hbm [shape: f32[128,128], index: 3, kind: input, shape index: {}]
  %s4 = inlined_call_operand.vmem [shape: f32[1,128], index: 4, kind: input, shape index: {}]
  %s5 = inlined_call_operand.vmem [shape: f32[2,128,128], index: 5, kind: input, shape index: {}]
  %s6 = inlined_call_operand.vmem [shape: f32[2,128], index: 6, kind: input, shape index: {}]
  %s7 = inlined_call_operand.hbm [shape: f32[2,128,128], index: 7, kind: input, shape index: {}]
  %s8 = inlined_call_operand.vmem [shape: f32[2,128], index: 8, kind: input, shape index: {}]
  %s9 = inlined_call_operand.hbm [shape: f32[128,128], index: 9, kind: input, shape index: {}]
  %s10 = inlined_call_operand.hbm [shape: f32[256,256], index: 10, kind: output, shape index: {}]
  %s11 = sld [smem:[#allocation0]]
  $region85: #{tpu_custom_call.1} parent=0
    _
  %s13 = ssub.s32 1, %s11
  %s14 = scalar_select 0, %s13, %s11
  $region1: #{tpu_custom_call.1} parent=0
    #allocation3 [shape = 'u8[65536]{0}', space=vmem, size = 0x10000, scoped, tag = 'input window, operand 3, single buffered']
    #allocation4 [shape = 's32[2]{0}', space=sflag, size = 0x8, scoped, tag = 'scoped memory for tpu_custom_call.1']
    #allocation5 [shape = 's32[2]{0}', space=sflag, size = 0x8, scoped, tag = 'scoped memory for tpu_custom_call.1']
    #allocation6 [shape = 'u8[131072]{0}', space=vmem, size = 0x20000, scoped, tag = 'input window, operand 7, single buffered']
    #allocation7 [shape = 's32[1]{0}', space=sflag, size = 0x4, scoped, tag = 'scoped memory for tpu_custom_call.1']
    #allocation8 [shape = 'u8[65536]{0}', space=vmem, size = 0x10000, scoped, tag = 'input window, operand 9, single buffered']
    #allocation9 [shape = 'u8[262144]{0}', space=vmem, size = 0x40000, scoped, tag = 'output window, operand 0']
    %15 = vsyncpa [#allocation4], 0
    %16 = vsyncpa [#allocation7], 0
    %17 = vsyncpa [#allocation5], 0
    %s18 = scalar_lea.sflag [#allocation5], 1
    %19 = vsyncpa %s18, 0
    loop: start=0, step=1, limit=4
    $region2: #{tpu_custom_call.1} parent=1 // loop_pre_header
      _
    $region3: #{tpu_custom_call.1} parent=1 // loop_header
      %s21 = sphi 0, %s25
      %p22 = scmp.ge.s32.totalorder %s21, 4
      %s31 = sphi 0, %s33
      %s34 = sphi 0, %s31
      %s35 = sphi 0, %s34
      %s51 = sphi 0, %s35
      %s55 = sphi 0, %s55
      %s57 = sphi 0, %s55
      %s58 = sphi 0, %s57
      %s72 = sphi 0, %s58
      %s76 = sphi 0, %s76
      %s78 = sphi 0, %s76
      %s79 = sphi 0, %s78
      %s93 = sphi 0, %s79
      %s97 = sphi 0, %s97
      %s99 = sphi 0, %s97
      %s100 = sphi 0, %s99
      %s114 = sphi 0, %s100
      %s118 = sphi 0, %s118
      %s120 = sphi 0, %s118
      %s121 = sphi 0, %s120
      %s135 = sphi 0, %s121
      %s139 = sphi 0, %s139
      %s141 = sphi 0, %s139
      %s142 = sphi 0, %s141
      %s156 = sphi 0, %s142
      %s160 = sphi 0, %s160
      %s162 = sphi 0, %s160
      %s163 = sphi 0, %s162
      %s177 = sphi 0, %s163
      %s181 = sphi 0, %s181
      %s183 = sphi 0, %s181
      %s184 = sphi 0, %s183
      %s198 = sphi 0, %s184
      %s202 = sphi 0, %s202
      %s204 = sphi 0, %s202
      %s205 = sphi 0, %s204
      %s219 = sphi 0, %s205
      %s223 = sphi 0, %s223
      %s225 = sphi 0, %s223
      %s226 = sphi 0, %s225
      %s240 = sphi 0, %s226
      %s246 = sphi 0, %s248
      %s249 = sphi 0, %s246
      %s250 = sphi 0, %s249
      %s266 = sphi 0, %s250
    $region4: #{tpu_custom_call.1} parent=1 // loop_header_branch
      %24 = sbr.rel (%p22) target = $region8
    $region5: #{tpu_custom_call.1} parent=1 // loop_body
      %s26 = ssub.s32 %s21, 1
      %s27 = ssub.s32 %s21, 2
      %s28 = sadd.s32 %s21, 1
      %s29 = ssub.s32 %s21, %s28
      %p30 = scmp.eq.s32.totalorder %s29, 0
      %s32 = sadd.s32 %s31, 1
      %s33 = scalar_select %p30, %s31, %s32
      %p36 = pneg %p30
      %p37 = scmp.eq.s32.totalorder %s21, 1
      %p38 = por %p36, %p37
      %p39 = scmp.ne.s32.totalorder %s31, %s34
      %p40 = scmp.eq.s32.totalorder %s21, 0
      %p41 = por %p39, %p40
      %p42 = scmp.ne.s32.totalorder %s31, %s34
      %p43 = scmp.eq.s32.totalorder %s26, 1
      %p44 = por %p42, %p43
      %p45 = scmp.ne.s32.totalorder %s34, %s35
      %p46 = scmp.eq.s32.totalorder %s26, 0
      %p47 = por %p45, %p46
      %p48 = scmp.ne.s32.totalorder %s34, %s35
      %p49 = scmp.eq.s32.totalorder %s27, 1
      %p50 = por %p48, %p49
      %p52 = scmp.ne.s32.totalorder %s35, %s51
      %p53 = scmp.eq.s32.totalorder %s27, 0
      %p54 = por %p52, %p53
      %s56 = sadd.s32 %s55, 1
      %p59 = scmp.eq.s32.totalorder %s21, 1
      %p60 = scmp.ne.s32.totalorder %s55, %s57
      %p61 = scmp.eq.s32.totalorder %s21, 0
      %p62 = por %p60, %p61
      %p63 = scmp.ne.s32.totalorder %s55, %s57
      %p64 = scmp.eq.s32.totalorder %s26, 1
      %p65 = por %p63, %p64
      %p66 = scmp.ne.s32.totalorder %s57, %s58
      %p67 = scmp.eq.s32.totalorder %s26, 0
      %p68 = por %p66, %p67
      %p69 = scmp.ne.s32.totalorder %s57, %s58
      %p70 = scmp.eq.s32.totalorder %s27, 1
      %p71 = por %p69, %p70
      %p73 = scmp.ne.s32.totalorder %s58, %s72
      %p74 = scmp.eq.s32.totalorder %s27, 0
      %p75 = por %p73, %p74
      %s77 = sadd.s32 %s76, 1
      %p80 = scmp.eq.s32.totalorder %s21, 1
      %p81 = scmp.ne.s32.totalorder %s76, %s78
      %p82 = scmp.eq.s32.totalorder %s21, 0
      %p83 = por %p81, %p82
      %p84 = scmp.ne.s32.totalorder %s76, %s78
      %p85 = scmp.eq.s32.totalorder %s26, 1
      %p86 = por %p84, %p85
      %p87 = scmp.ne.s32.totalorder %s78, %s79
      %p88 = scmp.eq.s32.totalorder %s26, 0
      %p89 = por %p87, %p88
      %p90 = scmp.ne.s32.totalorder %s78, %s79
      %p91 = scmp.eq.s32.totalorder %s27, 1
      %p92 = por %p90, %p91
      %p94 = scmp.ne.s32.totalorder %s79, %s93
      %p95 = scmp.eq.s32.totalorder %s27, 0
      %p96 = por %p94, %p95
      %s98 = sadd.s32 %s97, 1
      %p101 = scmp.eq.s32.totalorder %s21, 1
      %p102 = scmp.ne.s32.totalorder %s97, %s99
      %p103 = scmp.eq.s32.totalorder %s21, 0
      %p104 = por %p102, %p103
      %p105 = scmp.ne.s32.totalorder %s97, %s99
      %p106 = scmp.eq.s32.totalorder %s26, 1
      %p107 = por %p105, %p106
      %p108 = scmp.ne.s32.totalorder %s99, %s100
      %p109 = scmp.eq.s32.totalorder %s26, 0
      %p110 = por %p108, %p109
      %p111 = scmp.ne.s32.totalorder %s99, %s100
      %p112 = scmp.eq.s32.totalorder %s27, 1
      %p113 = por %p111, %p112
      %p115 = scmp.ne.s32.totalorder %s100, %s114
      %p116 = scmp.eq.s32.totalorder %s27, 0
      %p117 = por %p115, %p116
      %s119 = sadd.s32 %s118, 1
      %p122 = scmp.eq.s32.totalorder %s21, 1
      %p123 = scmp.ne.s32.totalorder %s118, %s120
      %p124 = scmp.eq.s32.totalorder %s21, 0
      %p125 = por %p123, %p124
      %p126 = scmp.ne.s32.totalorder %s118, %s120
      %p127 = scmp.eq.s32.totalorder %s26, 1
      %p128 = por %p126, %p127
      %p129 = scmp.ne.s32.totalorder %s120, %s121
      %p130 = scmp.eq.s32.totalorder %s26, 0
      %p131 = por %p129, %p130
      %p132 = scmp.ne.s32.totalorder %s120, %s121
      %p133 = scmp.eq.s32.totalorder %s27, 1
      %p134 = por %p132, %p133
      %p136 = scmp.ne.s32.totalorder %s121, %s135
      %p137 = scmp.eq.s32.totalorder %s27, 0
      %p138 = por %p136, %p137
      %s140 = sadd.s32 %s139, 1
      %p143 = scmp.eq.s32.totalorder %s21, 1
      %p144 = scmp.ne.s32.totalorder %s139, %s141
      %p145 = scmp.eq.s32.totalorder %s21, 0
      %p146 = por %p144, %p145
      %p147 = scmp.ne.s32.totalorder %s139, %s141
      %p148 = scmp.eq.s32.totalorder %s26, 1
      %p149 = por %p147, %p148
      %p150 = scmp.ne.s32.totalorder %s141, %s142
      %p151 = scmp.eq.s32.totalorder %s26, 0
      %p152 = por %p150, %p151
      %p153 = scmp.ne.s32.totalorder %s141, %s142
      %p154 = scmp.eq.s32.totalorder %s27, 1
      %p155 = por %p153, %p154
      %p157 = scmp.ne.s32.totalorder %s142, %s156
      %p158 = scmp.eq.s32.totalorder %s27, 0
      %p159 = por %p157, %p158
      %s161 = sadd.s32 %s160, 1
      %p164 = scmp.eq.s32.totalorder %s21, 1
      %p165 = scmp.ne.s32.totalorder %s160, %s162
      %p166 = scmp.eq.s32.totalorder %s21, 0
      %p167 = por %p165, %p166
      %p168 = scmp.ne.s32.totalorder %s160, %s162
      %p169 = scmp.eq.s32.totalorder %s26, 1
      %p170 = por %p168, %p169
      %p171 = scmp.ne.s32.totalorder %s162, %s163
      %p172 = scmp.eq.s32.totalorder %s26, 0
      %p173 = por %p171, %p172
      %p174 = scmp.ne.s32.totalorder %s162, %s163
      %p175 = scmp.eq.s32.totalorder %s27, 1
      %p176 = por %p174, %p175
      %p178 = scmp.ne.s32.totalorder %s163, %s177
      %p179 = scmp.eq.s32.totalorder %s27, 0
      %p180 = por %p178, %p179
      %s182 = sadd.s32 %s181, 1
      %p185 = scmp.eq.s32.totalorder %s21, 1
      %p186 = scmp.ne.s32.totalorder %s181, %s183
      %p187 = scmp.eq.s32.totalorder %s21, 0
      %p188 = por %p186, %p187
      %p189 = scmp.ne.s32.totalorder %s181, %s183
      %p190 = scmp.eq.s32.totalorder %s26, 1
      %p191 = por %p189, %p190
      %p192 = scmp.ne.s32.totalorder %s183, %s184
      %p193 = scmp.eq.s32.totalorder %s26, 0
      %p194 = por %p192, %p193
      %p195 = scmp.ne.s32.totalorder %s183, %s184
      %p196 = scmp.eq.s32.totalorder %s27, 1
      %p197 = por %p195, %p196
      %p199 = scmp.ne.s32.totalorder %s184, %s198
      %p200 = scmp.eq.s32.totalorder %s27, 0
      %p201 = por %p199, %p200
      %s203 = sadd.s32 %s202, 1
      %p206 = scmp.eq.s32.totalorder %s21, 1
      %p207 = scmp.ne.s32.totalorder %s202, %s204
      %p208 = scmp.eq.s32.totalorder %s21, 0
      %p209 = por %p207, %p208
      %p210 = scmp.ne.s32.totalorder %s202, %s204
      %p211 = scmp.eq.s32.totalorder %s26, 1
      %p212 = por %p210, %p211
      %p213 = scmp.ne.s32.totalorder %s204, %s205
      %p214 = scmp.eq.s32.totalorder %s26, 0
      %p215 = por %p213, %p214
      %p216 = scmp.ne.s32.totalorder %s204, %s205
      %p217 = scmp.eq.s32.totalorder %s27, 1
      %p218 = por %p216, %p217
      %p220 = scmp.ne.s32.totalorder %s205, %s219
      %p221 = scmp.eq.s32.totalorder %s27, 0
      %p222 = por %p220, %p221
      %s224 = sadd.s32 %s223, 1
      %p227 = scmp.eq.s32.totalorder %s21, 1
      %p228 = scmp.ne.s32.totalorder %s223, %s225
      %p229 = scmp.eq.s32.totalorder %s21, 0
      %p230 = por %p228, %p229
      %p231 = scmp.ne.s32.totalorder %s223, %s225
      %p232 = scmp.eq.s32.totalorder %s26, 1
      %p233 = por %p231, %p232
      %p234 = scmp.ne.s32.totalorder %s225, %s226
      %p235 = scmp.eq.s32.totalorder %s26, 0
      %p236 = por %p234, %p235
      %p237 = scmp.ne.s32.totalorder %s225, %s226
      %p238 = scmp.eq.s32.totalorder %s27, 1
      %p239 = por %p237, %p238
      %p241 = scmp.ne.s32.totalorder %s226, %s240
      %p242 = scmp.eq.s32.totalorder %s27, 0
      %p243 = por %p241, %p242
      %s244 = ssub.s32 %s21, %s28
      %p245 = scmp.eq.s32.totalorder %s244, 0
      %s247 = sadd.s32 %s246, 1
      %s248 = scalar_select %p245, %s246, %s247
      %p251 = pneg %p245
      %p252 = scmp.eq.s32.totalorder %s21, 1
      %p253 = por %p251, %p252
      %p254 = scmp.ne.s32.totalorder %s246, %s249
      %p255 = scmp.eq.s32.totalorder %s21, 0
      %p256 = por %p254, %p255
      %p257 = scmp.ne.s32.totalorder %s246, %s249
      %p258 = scmp.eq.s32.totalorder %s26, 1
      %p259 = por %p257, %p258
      %p260 = scmp.ne.s32.totalorder %s249, %s250
      %p261 = scmp.eq.s32.totalorder %s26, 0
      %p262 = por %p260, %p261
      %p263 = scmp.ne.s32.totalorder %s249, %s250
      %p264 = scmp.eq.s32.totalorder %s27, 1
      %p265 = por %p263, %p264
      %p267 = scmp.ne.s32.totalorder %s250, %s266
      %p268 = scmp.eq.s32.totalorder %s27, 0
      %p269 = por %p267, %p268
      %p270 = scmp.le.s32.totalorder 1, %s21
      %p271 = scmp.lt.s32.totalorder %s21, 3
      %p272 = pnand %p270, %p271
      %p273 = pneg %p272
      // Predicated region
      $region9: #{tpu_custom_call.1} parent=5 // pred_check
        _
      $region10: #{tpu_custom_call.1} parent=5 // pred_check_branch
        %275 = sbr.rel (%p272) target = $region12
      $region11: #{tpu_custom_call.1} parent=5 // pred_region
        %s276 = ssub.s32 %s21, 1
        // Predicated region
        $region13: #{tpu_custom_call.1} parent=11 // pred_check
          %p277 = pneg %p68
        $region14: #{tpu_custom_call.1} parent=11 // pred_check_branch
          %279 = sbr.rel (%p277) target = $region16
        $region15: #{tpu_custom_call.1} parent=11 // pred_region
          _
        $region16: #{tpu_custom_call.1} parent=11 // pred_fallthru
          _
        // Predicated region
        $region17: #{tpu_custom_call.1} parent=11 // pred_check
          %p280 = pneg %p89
        $region18: #{tpu_custom_call.1} parent=11 // pred_check_branch
          %282 = sbr.rel (%p280) target = $region20
        $region19: #{tpu_custom_call.1} parent=11 // pred_region
          _
        $region20: #{tpu_custom_call.1} parent=11 // pred_fallthru
          _
        // Predicated region
        $region21: #{tpu_custom_call.1} parent=11 // pred_check
          %p283 = pneg %p110
        $region22: #{tpu_custom_call.1} parent=11 // pred_check_branch
          %285 = sbr.rel (%p283) target = $region24
        $region23: #{tpu_custom_call.1} parent=11 // pred_region
          %287 = vsyncadd [#allocation4], 0
          %s288 = sshll.u32 %s3, 4
          %s289 = int_to_ptr.hbm [resolvable:$true] %s288
          %s290 = sshll.u32 [#allocation3], 4
          %s291 = int_to_ptr.vmem [resolvable:$true] %s290
          %296 = dma.hbm_to_vmem [thread:$0]  %s289, 2048, %s291, [#allocation4], 128, 128, 8
        $region24: #{tpu_custom_call.1} parent=11 // pred_fallthru
          _
        // Predicated region
        $region25: #{tpu_custom_call.1} parent=11 // pred_check
          %p297 = pneg %p131
        $region26: #{tpu_custom_call.1} parent=11 // pred_check_branch
          %299 = sbr.rel (%p297) target = $region28
        $region27: #{tpu_custom_call.1} parent=11 // pred_region
          _
        $region28: #{tpu_custom_call.1} parent=11 // pred_fallthru
          _
        // Predicated region
        $region29: #{tpu_custom_call.1} parent=11 // pred_check
          %p300 = pneg %p152
        $region30: #{tpu_custom_call.1} parent=11 // pred_check_branch
          %302 = sbr.rel (%p300) target = $region32
        $region31: #{tpu_custom_call.1} parent=11 // pred_region
          _
        $region32: #{tpu_custom_call.1} parent=11 // pred_fallthru
          _
        // Predicated region
        $region33: #{tpu_custom_call.1} parent=11 // pred_check
          %p303 = pneg %p173
        $region34: #{tpu_custom_call.1} parent=11 // pred_check_branch
          %305 = sbr.rel (%p303) target = $region36
        $region35: #{tpu_custom_call.1} parent=11 // pred_region
          _
        $region36: #{tpu_custom_call.1} parent=11 // pred_fallthru
          _
        // Predicated region
        $region37: #{tpu_custom_call.1} parent=11 // pred_check
          %p306 = pneg %p194
        $region38: #{tpu_custom_call.1} parent=11 // pred_check_branch
          %308 = sbr.rel (%p306) target = $region40
        $region39: #{tpu_custom_call.1} parent=11 // pred_region
          %310 = vsyncadd [#allocation7], 0
          %s311 = sshll.u32 %s7, 4
          %s312 = int_to_ptr.hbm [resolvable:$true] %s311
          %s313 = sshll.u32 [#allocation6], 4
          %s314 = int_to_ptr.vmem [resolvable:$true] %s313
          %319 = dma.hbm_to_vmem [thread:$0]  %s312, 4096, %s314, [#allocation7], 128, 128, 8
        $region40: #{tpu_custom_call.1} parent=11 // pred_fallthru
          _
        // Predicated region
        $region41: #{tpu_custom_call.1} parent=11 // pred_check
          %p320 = pneg %p215
        $region42: #{tpu_custom_call.1} parent=11 // pred_check_branch
          %322 = sbr.rel (%p320) target = $region44
        $region43: #{tpu_custom_call.1} parent=11 // pred_region
          _
        $region44: #{tpu_custom_call.1} parent=11 // pred_fallthru
          _
        // Predicated region
        $region45: #{tpu_custom_call.1} parent=11 // pred_check
          %p323 = pneg %p236
        $region46: #{tpu_custom_call.1} parent=11 // pred_check_branch
          %325 = sbr.rel (%p323) target = $region48
        $region47: #{tpu_custom_call.1} parent=11 // pred_region
          %327 = vsyncadd [#allocation7], 0
          %s328 = sshll.u32 %s9, 4
          %s329 = int_to_ptr.hbm [resolvable:$true] %s328
          %s330 = sshll.u32 [#allocation8], 4
          %s331 = int_to_ptr.vmem [resolvable:$true] %s330
          %336 = dma.hbm_to_vmem [thread:$0]  %s329, 2048, %s331, [#allocation7], 128, 128, 8
        $region48: #{tpu_custom_call.1} parent=11 // pred_fallthru
          _
      $region12: #{tpu_custom_call.1} parent=5 // pred_fallthru
        _
      %p337 = scmp.lt.s32.totalorder %s21, 2
      // Predicated region
      $region49: #{tpu_custom_call.1} parent=5 // pred_check
        %p338 = pneg %p337
      $region50: #{tpu_custom_call.1} parent=5 // pred_check_branch
        %340 = sbr.rel (%p338) target = $region52
      $region51: #{tpu_custom_call.1} parent=5 // pred_region
        // Predicated region
        $region53: #{tpu_custom_call.1} parent=51 // pred_check
          %p341 = pneg %p41
        $region54: #{tpu_custom_call.1} parent=51 // pred_check_branch
          %343 = sbr.rel (%p341) target = $region56
        $region55: #{tpu_custom_call.1} parent=51 // pred_region
          %s344 = smul.u32 16, %s21
          %p345 = scmp.lt.s32.totalorder %s344, 31
          %s346 = scalar_select %p345, %s344, 31
          %s347 = smul.addr %s346, 8
          %s348 = scalar_lea.vmem %s0, %s347
          %s349 = smul.u32 16, %s21
        $region56: #{tpu_custom_call.1} parent=51 // pred_fallthru
          _
      $region52: #{tpu_custom_call.1} parent=5 // pred_fallthru
        _
      %p350 = scmp.le.s32.totalorder 1, %s21
      %p351 = scmp.lt.s32.totalorder %s21, 3
      %p352 = pnand %p350, %p351
      %p353 = pneg %p352
      // Predicated region
      $region57: #{tpu_custom_call.1} parent=5 // pred_check
        _
      $region58: #{tpu_custom_call.1} parent=5 // pred_check_branch
        %355 = sbr.rel (%p352) target = $region60
      $region59: #{tpu_custom_call.1} parent=5 // pred_region
        %s356 = ssub.s32 %s21, 1
        // Predicated region
        $region61: #{tpu_custom_call.1} parent=59 // pred_check
          %p357 = pneg %p110
        $region62: #{tpu_custom_call.1} parent=59 // pred_check_branch
          %359 = sbr.rel (%p357) target = $region64
        $region63: #{tpu_custom_call.1} parent=59 // pred_region
          %361 = dma.done [#allocation4], 2048
        $region64: #{tpu_custom_call.1} parent=59 // pred_fallthru
          _
        // Predicated region
        $region65: #{tpu_custom_call.1} parent=59 // pred_check
          %p362 = pneg %p194
        $region66: #{tpu_custom_call.1} parent=59 // pred_check_branch
          %364 = sbr.rel (%p362) target = $region68
        $region67: #{tpu_custom_call.1} parent=59 // pred_region
          %366 = dma.done [#allocation7], 4096
        $region68: #{tpu_custom_call.1} parent=59 // pred_fallthru
          _
        // Predicated region
        $region69: #{tpu_custom_call.1} parent=59 // pred_check
          %p367 = pneg %p236
        $region70: #{tpu_custom_call.1} parent=59 // pred_check_branch
          %369 = sbr.rel (%p367) target = $region72
        $region71: #{tpu_custom_call.1} parent=59 // pred_region
          %371 = dma.done [#allocation7], 2048
        $region72: #{tpu_custom_call.1} parent=59 // pred_fallthru
          _
        %s372 = smul.u32 16, %s26
        %p373 = scmp.lt.s32.totalorder %s372, 31
        %s374 = scalar_select %p373, %s372, 31
        %s375 = smul.addr %s374, 8
        %s376 = scalar_lea.vmem %s0, %s375
        %p377 = pneg %p47
        %p378 = pneg %p44
        %p379 = pneg %p68
        %p380 = pneg %p65
        %p381 = pneg %p89
        %p382 = pneg %p86
        %p383 = pneg %p110
        %p384 = pneg %p107
        %p385 = pneg %p131
        %p386 = pneg %p128
        %p387 = pneg %p152
        %p388 = pneg %p149
        %p389 = pneg %p173
        %p390 = pneg %p170
        %p391 = pneg %p194
        %p392 = pneg %p191
        %p393 = pneg %p215
        %p394 = pneg %p212
        %p395 = pneg %p236
        %p396 = pneg %p233
        %p397 = pneg %p262
        %p398 = pneg %p259
        %s399 = sand.u32 %s249, 1
        %s400 = scalar_lea.sflag [#allocation5], %s399
        %s401 = sand.u32 %s249, 1
        %s402 = smul.addr %s401, 256
        %s403 = scalar_lea.vmem [#allocation9], %s402
        %s404 = smul.u32 16, %s26
        %p405 = scmp.lt.s32.totalorder %s404, 31
        %s406 = scalar_select %p405, %s404, 31
        %s407 = smul.addr %s406, 8
        %s408 = scalar_lea.vmem %s0, %s407
        %s409 = smul.u32 16, %s26
        %s410 = smul.u32 16, %s26
        %v411 = vld [vmem:[%s408] sm:$0xff]
        %v412 = vld [vmem:[%s408 + $0x8] sm:$0xff]
        %v413 = vld [vmem:[%s408 + $0x10] sm:$0xff]
        %v414 = vld [vmem:[%s408 + $0x18] sm:$0xff]
        %v415 = vld [vmem:[%s408 + $0x20] sm:$0xff]
        %v416 = vld [vmem:[%s408 + $0x28] sm:$0xff]
        %v417 = vld [vmem:[%s408 + $0x30] sm:$0xff]
        %v418 = vld [vmem:[%s408 + $0x38] sm:$0xff]
        %v419 = vld [vmem:[%s408 + $0x40] sm:$0xff]
        %v420 = vld [vmem:[%s408 + $0x48] sm:$0xff]
        %v421 = vld [vmem:[%s408 + $0x50] sm:$0xff]
        %v422 = vld [vmem:[%s408 + $0x58] sm:$0xff]
        %v423 = vld [vmem:[%s408 + $0x60] sm:$0xff]
        %v424 = vld [vmem:[%s408 + $0x68] sm:$0xff]
        %v425 = vld [vmem:[%s408 + $0x70] sm:$0xff]
        %v426 = vld [vmem:[%s408 + $0x78] sm:$0xff]
        %v427 = vld [vmem:[%s1] sm:$0x1]
        %v429 = vperm.slane %v427, 0
        %v431 = vsub.f32 %v411, %v429
        %v432 = vsub.f32 %v412, %v429
        %v433 = vsub.f32 %v413, %v429
        %v434 = vsub.f32 %v414, %v429
        %v435 = vsub.f32 %v415, %v429
        %v436 = vsub.f32 %v416, %v429
        %v437 = vsub.f32 %v417, %v429
        %v438 = vsub.f32 %v418, %v429
        %v439 = vsub.f32 %v419, %v429
        %v440 = vsub.f32 %v420, %v429
        %v441 = vsub.f32 %v421, %v429
        %v442 = vsub.f32 %v422, %v429
        %v443 = vsub.f32 %v423, %v429
        %v444 = vsub.f32 %v424, %v429
        %v445 = vsub.f32 %v425, %v429
        %v446 = vsub.f32 %v426, %v429
        %v447 = vld [vmem:[%s2] sm:$0x1]
        %v449 = vperm.slane %v447, 0
        %v451 = vmul.f32 %v431, %v449
        %v452 = vmul.f32 %v432, %v449
        %v453 = vmul.f32 %v433, %v449
        %v454 = vmul.f32 %v434, %v449
        %v455 = vmul.f32 %v435, %v449
        %v456 = vmul.f32 %v436, %v449
        %v457 = vmul.f32 %v437, %v449
        %v458 = vmul.f32 %v438, %v449
        %v459 = vmul.f32 %v439, %v449
        %v460 = vmul.f32 %v440, %v449
        %v461 = vmul.f32 %v441, %v449
        %v462 = vmul.f32 %v442, %v449
        %v463 = vmul.f32 %v443, %v449
        %v464 = vmul.f32 %v444, %v449
        %v465 = vmul.f32 %v445, %v449
        %v466 = vmul.f32 %v446, %v449
        %467 = vst [vmem:[#allocation2] sm:$0xff] 0.0
        %468 = vst [vmem:[#allocation2 + $0x8] sm:$0xff] 0.0
        %469 = vst [vmem:[#allocation2 + $0x10] sm:$0xff] 0.0
        %470 = vst [vmem:[#allocation2 + $0x18] sm:$0xff] 0.0
        %471 = vst [vmem:[#allocation2 + $0x20] sm:$0xff] 0.0
        %472 = vst [vmem:[#allocation2 + $0x28] sm:$0xff] 0.0
        %473 = vst [vmem:[#allocation2 + $0x30] sm:$0xff] 0.0
        %474 = vst [vmem:[#allocation2 + $0x38] sm:$0xff] 0.0
        %475 = vst [vmem:[#allocation2 + $0x40] sm:$0xff] 0.0
        %476 = vst [vmem:[#allocation2 + $0x48] sm:$0xff] 0.0
        %477 = vst [vmem:[#allocation2 + $0x50] sm:$0xff] 0.0
        %478 = vst [vmem:[#allocation2 + $0x58] sm:$0xff] 0.0
        %479 = vst [vmem:[#allocation2 + $0x60] sm:$0xff] 0.0
        %480 = vst [vmem:[#allocation2 + $0x68] sm:$0xff] 0.0
        %481 = vst [vmem:[#allocation2 + $0x70] sm:$0xff] 0.0
        %482 = vst [vmem:[#allocation2 + $0x78] sm:$0xff] 0.0
        %vm483 = vcmask 121856
        %484 = vst.msk [vmem:[#allocation2] sm:$0xff] %vm483, %v451
        %485 = vst.msk [vmem:[#allocation2 + $0x8] sm:$0xff] %vm483, %v452
        %486 = vst.msk [vmem:[#allocation2 + $0x10] sm:$0xff] %vm483, %v453
        %487 = vst.msk [vmem:[#allocation2 + $0x18] sm:$0xff] %vm483, %v454
        %488 = vst.msk [vmem:[#allocation2 + $0x20] sm:$0xff] %vm483, %v455
        %489 = vst.msk [vmem:[#allocation2 + $0x28] sm:$0xff] %vm483, %v456
        %490 = vst.msk [vmem:[#allocation2 + $0x30] sm:$0xff] %vm483, %v457
        %491 = vst.msk [vmem:[#allocation2 + $0x38] sm:$0xff] %vm483, %v458
        %492 = vst.msk [vmem:[#allocation2 + $0x40] sm:$0xff] %vm483, %v459
        %493 = vst.msk [vmem:[#allocation2 + $0x48] sm:$0xff] %vm483, %v460
        %494 = vst.msk [vmem:[#allocation2 + $0x50] sm:$0xff] %vm483, %v461
        %495 = vst.msk [vmem:[#allocation2 + $0x58] sm:$0xff] %vm483, %v462
        %496 = vst.msk [vmem:[#allocation2 + $0x60] sm:$0xff] %vm483, %v463
        %497 = vst.msk [vmem:[#allocation2 + $0x68] sm:$0xff] %vm483, %v464
        %498 = vst.msk [vmem:[#allocation2 + $0x70] sm:$0xff] %vm483, %v465
        %499 = vst.msk [vmem:[#allocation2 + $0x78] sm:$0xff] %vm483, %v466
        %vm500 = vcmask 130168
        %501 = vst.msk [vmem:[#allocation2] sm:$0xff] %vm500, 3.0
        %502 = vst.msk [vmem:[#allocation2 + $0x8] sm:$0xff] %vm500, 3.0
        %503 = vst.msk [vmem:[#allocation2 + $0x10] sm:$0xff] %vm500, 3.0
        %504 = vst.msk [vmem:[#allocation2 + $0x18] sm:$0xff] %vm500, 3.0
        %505 = vst.msk [vmem:[#allocation2 + $0x20] sm:$0xff] %vm500, 3.0
        %506 = vst.msk [vmem:[#allocation2 + $0x28] sm:$0xff] %vm500, 3.0
        %507 = vst.msk [vmem:[#allocation2 + $0x30] sm:$0xff] %vm500, 3.0
        %508 = vst.msk [vmem:[#allocation2 + $0x38] sm:$0xff] %vm500, 3.0
        %509 = vst.msk [vmem:[#allocation2 + $0x40] sm:$0xff] %vm500, 3.0
        %510 = vst.msk [vmem:[#allocation2 + $0x48] sm:$0xff] %vm500, 3.0
        %511 = vst.msk [vmem:[#allocation2 + $0x50] sm:$0xff] %vm500, 3.0
        %512 = vst.msk [vmem:[#allocation2 + $0x58] sm:$0xff] %vm500, 3.0
        %513 = vst.msk [vmem:[#allocation2 + $0x60] sm:$0xff] %vm500, 3.0
        %514 = vst.msk [vmem:[#allocation2 + $0x68] sm:$0xff] %vm500, 3.0
        %515 = vst.msk [vmem:[#allocation2 + $0x70] sm:$0xff] %vm500, 3.0
        %516 = vst.msk [vmem:[#allocation2 + $0x78] sm:$0xff] %vm500, 3.0
        %v517 = vld [vmem:[#allocation2] sm:$0xff]
        %v518 = vld [vmem:[#allocation2 + $0x8] sm:$0xff]
        %v519 = vld [vmem:[#allocation2 + $0x10] sm:$0xff]
        %v520 = vld [vmem:[#allocation2 + $0x18] sm:$0xff]
        %v521 = vld [vmem:[#allocation2 + $0x20] sm:$0xff]
        %v522 = vld [vmem:[#allocation2 + $0x28] sm:$0xff]
        %v523 = vld [vmem:[#allocation2 + $0x30] sm:$0xff]
        %v524 = vld [vmem:[#allocation2 + $0x38] sm:$0xff]
        %v525 = vld [vmem:[#allocation2 + $0x40] sm:$0xff]
        %v526 = vld [vmem:[#allocation2 + $0x48] sm:$0xff]
        %v527 = vld [vmem:[#allocation2 + $0x50] sm:$0xff]
        %v528 = vld [vmem:[#allocation2 + $0x58] sm:$0xff]
        %v529 = vld [vmem:[#allocation2 + $0x60] sm:$0xff]
        %v530 = vld [vmem:[#allocation2 + $0x68] sm:$0xff]
        %v531 = vld [vmem:[#allocation2 + $0x70] sm:$0xff]
        %v532 = vld [vmem:[#allocation2 + $0x78] sm:$0xff]
        %v533 = vmul.f32 %v517, %v517
        %v534 = vmul.f32 %v518, %v518
        %v535 = vmul.f32 %v519, %v519
        %v536 = vmul.f32 %v520, %v520
        %v537 = vmul.f32 %v521, %v521
        %v538 = vmul.f32 %v522, %v522
        %v539 = vmul.f32 %v523, %v523
        %v540 = vmul.f32 %v524, %v524
        %v541 = vmul.f32 %v525, %v525
        %v542 = vmul.f32 %v526, %v526
        %v543 = vmul.f32 %v527, %v527
        %v544 = vmul.f32 %v528, %v528
        %v545 = vmul.f32 %v529, %v529
        %v546 = vmul.f32 %v530, %v530
        %v547 = vmul.f32 %v531, %v531
        %v548 = vmul.f32 %v532, %v532
        %549 = vadd.xlane.f32.xlu0 %v533
        %v550 = vpop.xlane.xlu0 %549
        %551 = vadd.xlane.f32.xlu0 %v534
        %v552 = vpop.xlane.xlu0 %551
        %553 = vadd.xlane.f32.xlu0 %v535
        %v554 = vpop.xlane.xlu0 %553
        %555 = vadd.xlane.f32.xlu0 %v536
        %v556 = vpop.xlane.xlu0 %555
        %557 = vadd.xlane.f32.xlu0 %v537
        %v558 = vpop.xlane.xlu0 %557
        %559 = vadd.xlane.f32.xlu0 %v538
        %v560 = vpop.xlane.xlu0 %559
        %561 = vadd.xlane.f32.xlu0 %v539
        %v562 = vpop.xlane.xlu0 %561
        %563 = vadd.xlane.f32.xlu0 %v540
        %v564 = vpop.xlane.xlu0 %563
        %565 = vadd.xlane.f32.xlu0 %v541
        %v566 = vpop.xlane.xlu0 %565
        %567 = vadd.xlane.f32.xlu0 %v542
        %v568 = vpop.xlane.xlu0 %567
        %569 = vadd.xlane.f32.xlu0 %v543
        %v570 = vpop.xlane.xlu0 %569
        %571 = vadd.xlane.f32.xlu0 %v544
        %v572 = vpop.xlane.xlu0 %571
        %573 = vadd.xlane.f32.xlu0 %v545
        %v574 = vpop.xlane.xlu0 %573
        %575 = vadd.xlane.f32.xlu0 %v546
        %v576 = vpop.xlane.xlu0 %575
        %577 = vadd.xlane.f32.xlu0 %v547
        %v578 = vpop.xlane.xlu0 %577
        %579 = vadd.xlane.f32.xlu0 %v548
        %v580 = vpop.xlane.xlu0 %579
        %v581 = vadd.f32 %v550, 1e-08
        %v582 = vadd.f32 %v552, 1e-08
        %v583 = vadd.f32 %v554, 1e-08
        %v584 = vadd.f32 %v556, 1e-08
        %v585 = vadd.f32 %v558, 1e-08
        %v586 = vadd.f32 %v560, 1e-08
        %v587 = vadd.f32 %v562, 1e-08
        %v588 = vadd.f32 %v564, 1e-08
        %v589 = vadd.f32 %v566, 1e-08
        %v590 = vadd.f32 %v568, 1e-08
        %v591 = vadd.f32 %v570, 1e-08
        %v592 = vadd.f32 %v572, 1e-08
        %v593 = vadd.f32 %v574, 1e-08
        %v594 = vadd.f32 %v576, 1e-08
        %v595 = vadd.f32 %v578, 1e-08
        %v596 = vadd.f32 %v580, 1e-08
        %v597 = vrsqrt.pop %v581
        %v598 = vmul.f32 %v597, %v581
        %v599 = vmul.f32 %v598, %v597
        %v600 = vmul.f32 0.5, %v599
        %v601 = vsub.f32 1.5, %v600
        %v602 = vmul.f32 %v597, %v601
        %vm603 = vweird.f32 %v581
        %vm604 = vweird.f32 %v597
        %vm605 = vmor %vm603, %vm604
        %v606 = vsel %vm605, %v597, %v602
        %v607 = vrsqrt.pop %v582
        %v608 = vmul.f32 %v607, %v582
        %v609 = vmul.f32 %v608, %v607
        %v610 = vmul.f32 0.5, %v609
        %v611 = vsub.f32 1.5, %v610
        %v612 = vmul.f32 %v607, %v611
        %vm613 = vweird.f32 %v582
        %vm614 = vweird.f32 %v607
        %vm615 = vmor %vm613, %vm614
        %v616 = vsel %vm615, %v607, %v612
        %v617 = vrsqrt.pop %v583
        %v618 = vmul.f32 %v617, %v583
        %v619 = vmul.f32 %v618, %v617
        %v620 = vmul.f32 0.5, %v619
        %v621 = vsub.f32 1.5, %v620
        %v622 = vmul.f32 %v617, %v621
        %vm623 = vweird.f32 %v583
        %vm624 = vweird.f32 %v617
        %vm625 = vmor %vm623, %vm624
        %v626 = vsel %vm625, %v617, %v622
        %v627 = vrsqrt.pop %v584
        %v628 = vmul.f32 %v627, %v584
        %v629 = vmul.f32 %v628, %v627
        %v630 = vmul.f32 0.5, %v629
        %v631 = vsub.f32 1.5, %v630
        %v632 = vmul.f32 %v627, %v631
        %vm633 = vweird.f32 %v584
        %vm634 = vweird.f32 %v627
        %vm635 = vmor %vm633, %vm634
        %v636 = vsel %vm635, %v627, %v632
        %v637 = vrsqrt.pop %v585
        %v638 = vmul.f32 %v637, %v585
        %v639 = vmul.f32 %v638, %v637
        %v640 = vmul.f32 0.5, %v639
        %v641 = vsub.f32 1.5, %v640
        %v642 = vmul.f32 %v637, %v641
        %vm643 = vweird.f32 %v585
        %vm644 = vweird.f32 %v637
        %vm645 = vmor %vm643, %vm644
        %v646 = vsel %vm645, %v637, %v642
        %v647 = vrsqrt.pop %v586
        %v648 = vmul.f32 %v647, %v586
        %v649 = vmul.f32 %v648, %v647
        %v650 = vmul.f32 0.5, %v649
        %v651 = vsub.f32 1.5, %v650
        %v652 = vmul.f32 %v647, %v651
        %vm653 = vweird.f32 %v586
        %vm654 = vweird.f32 %v647
        %vm655 = vmor %vm653, %vm654
        %v656 = vsel %vm655, %v647, %v652
        %v657 = vrsqrt.pop %v587
        %v658 = vmul.f32 %v657, %v587
        %v659 = vmul.f32 %v658, %v657
        %v660 = vmul.f32 0.5, %v659
        %v661 = vsub.f32 1.5, %v660
        %v662 = vmul.f32 %v657, %v661
        %vm663 = vweird.f32 %v587
        %vm664 = vweird.f32 %v657
        %vm665 = vmor %vm663, %vm664
        %v666 = vsel %vm665, %v657, %v662
        %v667 = vrsqrt.pop %v588
        %v668 = vmul.f32 %v667, %v588
        %v669 = vmul.f32 %v668, %v667
        %v670 = vmul.f32 0.5, %v669
        %v671 = vsub.f32 1.5, %v670
        %v672 = vmul.f32 %v667, %v671
        %vm673 = vweird.f32 %v588
        %vm674 = vweird.f32 %v667
        %vm675 = vmor %vm673, %vm674
        %v676 = vsel %vm675, %v667, %v672
        %v677 = vrsqrt.pop %v589
        %v678 = vmul.f32 %v677, %v589
        %v679 = vmul.f32 %v678, %v677
        %v680 = vmul.f32 0.5, %v679
        %v681 = vsub.f32 1.5, %v680
        %v682 = vmul.f32 %v677, %v681
        %vm683 = vweird.f32 %v589
        %vm684 = vweird.f32 %v677
        %vm685 = vmor %vm683, %vm684
        %v686 = vsel %vm685, %v677, %v682
        %v687 = vrsqrt.pop %v590
        %v688 = vmul.f32 %v687, %v590
        %v689 = vmul.f32 %v688, %v687
        %v690 = vmul.f32 0.5, %v689
        %v691 = vsub.f32 1.5, %v690
        %v692 = vmul.f32 %v687, %v691
        %vm693 = vweird.f32 %v590
        %vm694 = vweird.f32 %v687
        %vm695 = vmor %vm693, %vm694
        %v696 = vsel %vm695, %v687, %v692
        %v697 = vrsqrt.pop %v591
        %v698 = vmul.f32 %v697, %v591
        %v699 = vmul.f32 %v698, %v697
        %v700 = vmul.f32 0.5, %v699
        %v701 = vsub.f32 1.5, %v700
        %v702 = vmul.f32 %v697, %v701
        %vm703 = vweird.f32 %v591
        %vm704 = vweird.f32 %v697
        %vm705 = vmor %vm703, %vm704
        %v706 = vsel %vm705, %v697, %v702
        %v707 = vrsqrt.pop %v592
        %v708 = vmul.f32 %v707, %v592
        %v709 = vmul.f32 %v708, %v707
        %v710 = vmul.f32 0.5, %v709
        %v711 = vsub.f32 1.5, %v710
        %v712 = vmul.f32 %v707, %v711
        %vm713 = vweird.f32 %v592
        %vm714 = vweird.f32 %v707
        %vm715 = vmor %vm713, %vm714
        %v716 = vsel %vm715, %v707, %v712
        %v717 = vrsqrt.pop %v593
        %v718 = vmul.f32 %v717, %v593
        %v719 = vmul.f32 %v718, %v717
        %v720 = vmul.f32 0.5, %v719
        %v721 = vsub.f32 1.5, %v720
        %v722 = vmul.f32 %v717, %v721
        %vm723 = vweird.f32 %v593
        %vm724 = vweird.f32 %v717
        %vm725 = vmor %vm723, %vm724
        %v726 = vsel %vm725, %v717, %v722
        %v727 = vrsqrt.pop %v594
        %v728 = vmul.f32 %v727, %v594
        %v729 = vmul.f32 %v728, %v727
        %v730 = vmul.f32 0.5, %v729
        %v731 = vsub.f32 1.5, %v730
        %v732 = vmul.f32 %v727, %v731
        %vm733 = vweird.f32 %v594
        %vm734 = vweird.f32 %v727
        %vm735 = vmor %vm733, %vm734
        %v736 = vsel %vm735, %v727, %v732
        %v737 = vrsqrt.pop %v595
        %v738 = vmul.f32 %v737, %v595
        %v739 = vmul.f32 %v738, %v737
        %v740 = vmul.f32 0.5, %v739
        %v741 = vsub.f32 1.5, %v740
        %v742 = vmul.f32 %v737, %v741
        %vm743 = vweird.f32 %v595
        %vm744 = vweird.f32 %v737
        %vm745 = vmor %vm743, %vm744
        %v746 = vsel %vm745, %v737, %v742
        %v747 = vrsqrt.pop %v596
        %v748 = vmul.f32 %v747, %v596
        %v749 = vmul.f32 %v748, %v747
        %v750 = vmul.f32 0.5, %v749
        %v751 = vsub.f32 1.5, %v750
        %v752 = vmul.f32 %v747, %v751
        %vm753 = vweird.f32 %v596
        %vm754 = vweird.f32 %v747
        %vm755 = vmor %vm753, %vm754
        %v756 = vsel %vm755, %v747, %v752
        %v757 = vmul.f32 %v517, %v606
        %v758 = vmul.f32 %v518, %v616
        %v759 = vmul.f32 %v519, %v626
        %v760 = vmul.f32 %v520, %v636
        %v761 = vmul.f32 %v521, %v646
        %v762 = vmul.f32 %v522, %v656
        %v763 = vmul.f32 %v523, %v666
        %v764 = vmul.f32 %v524, %v676
        %v765 = vmul.f32 %v525, %v686
        %v766 = vmul.f32 %v526, %v696
        %v767 = vmul.f32 %v527, %v706
        %v768 = vmul.f32 %v528, %v716
        %v769 = vmul.f32 %v529, %v726
        %v770 = vmul.f32 %v530, %v736
        %v771 = vmul.f32 %v531, %v746
        %v772 = vmul.f32 %v532, %v756
        %v773 = vld [vmem:[#allocation3] sm:$0xff]
        %v774 = vld [vmem:[#allocation3 + $0x8] sm:$0xff]
        %v775 = vld [vmem:[#allocation3 + $0x10] sm:$0xff]
        %v776 = vld [vmem:[#allocation3 + $0x18] sm:$0xff]
        %v777 = vld [vmem:[#allocation3 + $0x20] sm:$0xff]
        %v778 = vld [vmem:[#allocation3 + $0x28] sm:$0xff]
        %v779 = vld [vmem:[#allocation3 + $0x30] sm:$0xff]
        %v780 = vld [vmem:[#allocation3 + $0x38] sm:$0xff]
        %v781 = vld [vmem:[#allocation3 + $0x40] sm:$0xff]
        %v782 = vld [vmem:[#allocation3 + $0x48] sm:$0xff]
        %v783 = vld [vmem:[#allocation3 + $0x50] sm:$0xff]
        %v784 = vld [vmem:[#allocation3 + $0x58] sm:$0xff]
        %v785 = vld [vmem:[#allocation3 + $0x60] sm:$0xff]
        %v786 = vld [vmem:[#allocation3 + $0x68] sm:$0xff]
        %v787 = vld [vmem:[#allocation3 + $0x70] sm:$0xff]
        %v788 = vld [vmem:[#allocation3 + $0x78] sm:$0xff]
        %789 = vmatpush.msra.mxu0 %v788
        %790 = vmatpush.msra.mxu0 %v787
        %791 = vmatpush.msra.mxu0 %v786
        %792 = vmatpush.msra.mxu0 %v785
        %793 = vmatpush.msra.mxu0 %v784
        %794 = vmatpush.msra.mxu0 %v783
        %795 = vmatpush.msra.mxu0 %v782
        %796 = vmatpush.msra.mxu0 %v781
        %797 = vmatpush.msra.mxu0 %v780
        %798 = vmatpush.msra.mxu0 %v779
        %799 = vmatpush.msra.mxu0 %v778
        %800 = vmatpush.msra.mxu0 %v777
        %801 = vmatpush.msra.mxu0 %v776
        %802 = vmatpush.msra.mxu0 %v775
        %803 = vmatpush.msra.mxu0 %v774
        %804 = vmatpush.msra.mxu0 %v773
        %805 = vmatmul.f32.gmra.mxu0 %v757
        %v806 = vpop.f32.mrf.mxu0
        %v807 = vadd.f32 0.0, %v806
        %808 = vmatmul.f32.gmra.mxu0 %v758
        %v809 = vpop.f32.mrf.mxu0
        %v810 = vadd.f32 0.0, %v809
        %811 = vmatmul.f32.gmra.mxu0 %v759
        %v812 = vpop.f32.mrf.mxu0
        %v813 = vadd.f32 0.0, %v812
        %814 = vmatmul.f32.gmra.mxu0 %v760
        %v815 = vpop.f32.mrf.mxu0
        %v816 = vadd.f32 0.0, %v815
        %817 = vmatmul.f32.gmra.mxu0 %v761
        %v818 = vpop.f32.mrf.mxu0
        %v819 = vadd.f32 0.0, %v818
        %820 = vmatmul.f32.gmra.mxu0 %v762
        %v821 = vpop.f32.mrf.mxu0
        %v822 = vadd.f32 0.0, %v821
        %823 = vmatmul.f32.gmra.mxu0 %v763
        %v824 = vpop.f32.mrf.mxu0
        %v825 = vadd.f32 0.0, %v824
        %826 = vmatmul.f32.gmra.mxu0 %v764
        %v827 = vpop.f32.mrf.mxu0
        %v828 = vadd.f32 0.0, %v827
        %829 = vmatmul.f32.gmra.mxu0 %v765
        %v830 = vpop.f32.mrf.mxu0
        %v831 = vadd.f32 0.0, %v830
        %832 = vmatmul.f32.gmra.mxu0 %v766
        %v833 = vpop.f32.mrf.mxu0
        %v834 = vadd.f32 0.0, %v833
        %835 = vmatmul.f32.gmra.mxu0 %v767
        %v836 = vpop.f32.mrf.mxu0
        %v837 = vadd.f32 0.0, %v836
        %838 = vmatmul.f32.gmra.mxu0 %v768
        %v839 = vpop.f32.mrf.mxu0
        %v840 = vadd.f32 0.0, %v839
        %841 = vmatmul.f32.gmra.mxu0 %v769
        %v842 = vpop.f32.mrf.mxu0
        %v843 = vadd.f32 0.0, %v842
        %844 = vmatmul.f32.gmra.mxu0 %v770
        %v845 = vpop.f32.mrf.mxu0
        %v846 = vadd.f32 0.0, %v845
        %847 = vmatmul.f32.gmra.mxu0 %v771
        %v848 = vpop.f32.mrf.mxu0
        %v849 = vadd.f32 0.0, %v848
        %850 = vmatmul.f32.gmra.mxu0 %v772
        %v851 = vpop.f32.mrf.mxu0
        %v852 = vadd.f32 0.0, %v851
        %853 = vdwg.mxu0
        %v854 = vld [vmem:[%s4] sm:$0x1]
        %v856 = vperm.slane %v854, 0
        %v858 = vmul.f32 %v807, %v856
        %v859 = vmul.f32 %v810, %v856
        %v860 = vmul.f32 %v813, %v856
        %v861 = vmul.f32 %v816, %v856
        %v862 = vmul.f32 %v819, %v856
        %v863 = vmul.f32 %v822, %v856
        %v864 = vmul.f32 %v825, %v856
        %v865 = vmul.f32 %v828, %v856
        %v866 = vmul.f32 %v831, %v856
        %v867 = vmul.f32 %v834, %v856
        %v868 = vmul.f32 %v837, %v856
        %v869 = vmul.f32 %v840, %v856
        %v870 = vmul.f32 %v843, %v856
        %v871 = vmul.f32 %v846, %v856
        %v872 = vmul.f32 %v849, %v856
        %v873 = vmul.f32 %v852, %v856
        %v874 = vmul.f32 %v858, %v858
        %v875 = vmul.f32 %v859, %v859
        %v876 = vmul.f32 %v860, %v860
        %v877 = vmul.f32 %v861, %v861
        %v878 = vmul.f32 %v862, %v862
        %v879 = vmul.f32 %v863, %v863
        %v880 = vmul.f32 %v864, %v864
        %v881 = vmul.f32 %v865, %v865
        %v882 = vmul.f32 %v866, %v866
        %v883 = vmul.f32 %v867, %v867
        %v884 = vmul.f32 %v868, %v868
        %v885 = vmul.f32 %v869, %v869
        %v886 = vmul.f32 %v870, %v870
        %v887 = vmul.f32 %v871, %v871
        %v888 = vmul.f32 %v872, %v872
        %v889 = vmul.f32 %v873, %v873
        %890 = vadd.xlane.f32.xlu0 %v874
        %v891 = vpop.xlane.xlu0 %890
        %892 = vadd.xlane.f32.xlu0 %v875
        %v893 = vpop.xlane.xlu0 %892
        %894 = vadd.xlane.f32.xlu0 %v876
        %v895 = vpop.xlane.xlu0 %894
        %896 = vadd.xlane.f32.xlu0 %v877
        %v897 = vpop.xlane.xlu0 %896
        %898 = vadd.xlane.f32.xlu0 %v878
        %v899 = vpop.xlane.xlu0 %898
        %900 = vadd.xlane.f32.xlu0 %v879
        %v901 = vpop.xlane.xlu0 %900
        %902 = vadd.xlane.f32.xlu0 %v880
        %v903 = vpop.xlane.xlu0 %902
        %904 = vadd.xlane.f32.xlu0 %v881
        %v905 = vpop.xlane.xlu0 %904
        %906 = vadd.xlane.f32.xlu0 %v882
        %v907 = vpop.xlane.xlu0 %906
        %908 = vadd.xlane.f32.xlu0 %v883
        %v909 = vpop.xlane.xlu0 %908
        %910 = vadd.xlane.f32.xlu0 %v884
        %v911 = vpop.xlane.xlu0 %910
        %912 = vadd.xlane.f32.xlu0 %v885
        %v913 = vpop.xlane.xlu0 %912
        %914 = vadd.xlane.f32.xlu0 %v886
        %v915 = vpop.xlane.xlu0 %914
        %916 = vadd.xlane.f32.xlu0 %v887
        %v917 = vpop.xlane.xlu0 %916
        %918 = vadd.xlane.f32.xlu0 %v888
        %v919 = vpop.xlane.xlu0 %918
        %920 = vadd.xlane.f32.xlu0 %v889
        %v921 = vpop.xlane.xlu0 %920
        %v922 = vadd.f32 %v891, 1e-08
        %v923 = vadd.f32 %v893, 1e-08
        %v924 = vadd.f32 %v895, 1e-08
        %v925 = vadd.f32 %v897, 1e-08
        %v926 = vadd.f32 %v899, 1e-08
        %v927 = vadd.f32 %v901, 1e-08
        %v928 = vadd.f32 %v903, 1e-08
        %v929 = vadd.f32 %v905, 1e-08
        %v930 = vadd.f32 %v907, 1e-08
        %v931 = vadd.f32 %v909, 1e-08
        %v932 = vadd.f32 %v911, 1e-08
        %v933 = vadd.f32 %v913, 1e-08
        %v934 = vadd.f32 %v915, 1e-08
        %v935 = vadd.f32 %v917, 1e-08
        %v936 = vadd.f32 %v919, 1e-08
        %v937 = vadd.f32 %v921, 1e-08
        %v938 = vrsqrt.pop %v922
        %v939 = vmul.f32 %v938, %v922
        %v940 = vmul.f32 %v939, %v938
        %v941 = vmul.f32 0.5, %v940
        %v942 = vsub.f32 1.5, %v941
        %v943 = vmul.f32 %v938, %v942
        %vm944 = vweird.f32 %v922
        %vm945 = vweird.f32 %v938
        %vm946 = vmor %vm944, %vm945
        %v947 = vsel %vm946, %v938, %v943
        %v948 = vrsqrt.pop %v923
        %v949 = vmul.f32 %v948, %v923
        %v950 = vmul.f32 %v949, %v948
        %v951 = vmul.f32 0.5, %v950
        %v952 = vsub.f32 1.5, %v951
        %v953 = vmul.f32 %v948, %v952
        %vm954 = vweird.f32 %v923
        %vm955 = vweird.f32 %v948
        %vm956 = vmor %vm954, %vm955
        %v957 = vsel %vm956, %v948, %v953
        %v958 = vrsqrt.pop %v924
        %v959 = vmul.f32 %v958, %v924
        %v960 = vmul.f32 %v959, %v958
        %v961 = vmul.f32 0.5, %v960
        %v962 = vsub.f32 1.5, %v961
        %v963 = vmul.f32 %v958, %v962
        %vm964 = vweird.f32 %v924
        %vm965 = vweird.f32 %v958
        %vm966 = vmor %vm964, %vm965
        %v967 = vsel %vm966, %v958, %v963
        %v968 = vrsqrt.pop %v925
        %v969 = vmul.f32 %v968, %v925
        %v970 = vmul.f32 %v969, %v968
        %v971 = vmul.f32 0.5, %v970
        %v972 = vsub.f32 1.5, %v971
        %v973 = vmul.f32 %v968, %v972
        %vm974 = vweird.f32 %v925
        %vm975 = vweird.f32 %v968
        %vm976 = vmor %vm974, %vm975
        %v977 = vsel %vm976, %v968, %v973
        %v978 = vrsqrt.pop %v926
        %v979 = vmul.f32 %v978, %v926
        %v980 = vmul.f32 %v979, %v978
        %v981 = vmul.f32 0.5, %v980
        %v982 = vsub.f32 1.5, %v981
        %v983 = vmul.f32 %v978, %v982
        %vm984 = vweird.f32 %v926
        %vm985 = vweird.f32 %v978
        %vm986 = vmor %vm984, %vm985
        %v987 = vsel %vm986, %v978, %v983
        %v988 = vrsqrt.pop %v927
        %v989 = vmul.f32 %v988, %v927
        %v990 = vmul.f32 %v989, %v988
        %v991 = vmul.f32 0.5, %v990
        %v992 = vsub.f32 1.5, %v991
        %v993 = vmul.f32 %v988, %v992
        %vm994 = vweird.f32 %v927
        %vm995 = vweird.f32 %v988
        %vm996 = vmor %vm994, %vm995
        %v997 = vsel %vm996, %v988, %v993
        %v998 = vrsqrt.pop %v928
        %v999 = vmul.f32 %v998, %v928
        %v1000 = vmul.f32 %v999, %v998
        %v1001 = vmul.f32 0.5, %v1000
        %v1002 = vsub.f32 1.5, %v1001
        %v1003 = vmul.f32 %v998, %v1002
        %vm1004 = vweird.f32 %v928
        %vm1005 = vweird.f32 %v998
        %vm1006 = vmor %vm1004, %vm1005
        %v1007 = vsel %vm1006, %v998, %v1003
        %v1008 = vrsqrt.pop %v929
        %v1009 = vmul.f32 %v1008, %v929
        %v1010 = vmul.f32 %v1009, %v1008
        %v1011 = vmul.f32 0.5, %v1010
        %v1012 = vsub.f32 1.5, %v1011
        %v1013 = vmul.f32 %v1008, %v1012
        %vm1014 = vweird.f32 %v929
        %vm1015 = vweird.f32 %v1008
        %vm1016 = vmor %vm1014, %vm1015
        %v1017 = vsel %vm1016, %v1008, %v1013
        %v1018 = vrsqrt.pop %v930
        %v1019 = vmul.f32 %v1018, %v930
        %v1020 = vmul.f32 %v1019, %v1018
        %v1021 = vmul.f32 0.5, %v1020
        %v1022 = vsub.f32 1.5, %v1021
        %v1023 = vmul.f32 %v1018, %v1022
        %vm1024 = vweird.f32 %v930
        %vm1025 = vweird.f32 %v1018
        %vm1026 = vmor %vm1024, %vm1025
        %v1027 = vsel %vm1026, %v1018, %v1023
        %v1028 = vrsqrt.pop %v931
        %v1029 = vmul.f32 %v1028, %v931
        %v1030 = vmul.f32 %v1029, %v1028
        %v1031 = vmul.f32 0.5, %v1030
        %v1032 = vsub.f32 1.5, %v1031
        %v1033 = vmul.f32 %v1028, %v1032
        %vm1034 = vweird.f32 %v931
        %vm1035 = vweird.f32 %v1028
        %vm1036 = vmor %vm1034, %vm1035
        %v1037 = vsel %vm1036, %v1028, %v1033
        %v1038 = vrsqrt.pop %v932
        %v1039 = vmul.f32 %v1038, %v932
        %v1040 = vmul.f32 %v1039, %v1038
        %v1041 = vmul.f32 0.5, %v1040
        %v1042 = vsub.f32 1.5, %v1041
        %v1043 = vmul.f32 %v1038, %v1042
        %vm1044 = vweird.f32 %v932
        %vm1045 = vweird.f32 %v1038
        %vm1046 = vmor %vm1044, %vm1045
        %v1047 = vsel %vm1046, %v1038, %v1043
        %v1048 = vrsqrt.pop %v933
        %v1049 = vmul.f32 %v1048, %v933
        %v1050 = vmul.f32 %v1049, %v1048
        %v1051 = vmul.f32 0.5, %v1050
        %v1052 = vsub.f32 1.5, %v1051
        %v1053 = vmul.f32 %v1048, %v1052
        %vm1054 = vweird.f32 %v933
        %vm1055 = vweird.f32 %v1048
        %vm1056 = vmor %vm1054, %vm1055
        %v1057 = vsel %vm1056, %v1048, %v1053
        %v1058 = vrsqrt.pop %v934
        %v1059 = vmul.f32 %v1058, %v934
        %v1060 = vmul.f32 %v1059, %v1058
        %v1061 = vmul.f32 0.5, %v1060
        %v1062 = vsub.f32 1.5, %v1061
        %v1063 = vmul.f32 %v1058, %v1062
        %vm1064 = vweird.f32 %v934
        %vm1065 = vweird.f32 %v1058
        %vm1066 = vmor %vm1064, %vm1065
        %v1067 = vsel %vm1066, %v1058, %v1063
        %v1068 = vrsqrt.pop %v935
        %v1069 = vmul.f32 %v1068, %v935
        %v1070 = vmul.f32 %v1069, %v1068
        %v1071 = vmul.f32 0.5, %v1070
        %v1072 = vsub.f32 1.5, %v1071
        %v1073 = vmul.f32 %v1068, %v1072
        %vm1074 = vweird.f32 %v935
        %vm1075 = vweird.f32 %v1068
        %vm1076 = vmor %vm1074, %vm1075
        %v1077 = vsel %vm1076, %v1068, %v1073
        %v1078 = vrsqrt.pop %v936
        %v1079 = vmul.f32 %v1078, %v936
        %v1080 = vmul.f32 %v1079, %v1078
        %v1081 = vmul.f32 0.5, %v1080
        %v1082 = vsub.f32 1.5, %v1081
        %v1083 = vmul.f32 %v1078, %v1082
        %vm1084 = vweird.f32 %v936
        %vm1085 = vweird.f32 %v1078
        %vm1086 = vmor %vm1084, %vm1085
        %v1087 = vsel %vm1086, %v1078, %v1083
        %v1088 = vrsqrt.pop %v937
        %v1089 = vmul.f32 %v1088, %v937
        %v1090 = vmul.f32 %v1089, %v1088
        %v1091 = vmul.f32 0.5, %v1090
        %v1092 = vsub.f32 1.5, %v1091
        %v1093 = vmul.f32 %v1088, %v1092
        %vm1094 = vweird.f32 %v937
        %vm1095 = vweird.f32 %v1088
        %vm1096 = vmor %vm1094, %vm1095
        %v1097 = vsel %vm1096, %v1088, %v1093
        %v1098 = vmul.f32 %v858, %v947
        %v1099 = vmul.f32 %v859, %v957
        %v1100 = vmul.f32 %v860, %v967
        %v1101 = vmul.f32 %v861, %v977
        %v1102 = vmul.f32 %v862, %v987
        %v1103 = vmul.f32 %v863, %v997
        %v1104 = vmul.f32 %v864, %v1007
        %v1105 = vmul.f32 %v865, %v1017
        %v1106 = vmul.f32 %v866, %v1027
        %v1107 = vmul.f32 %v867, %v1037
        %v1108 = vmul.f32 %v868, %v1047
        %v1109 = vmul.f32 %v869, %v1057
        %v1110 = vmul.f32 %v870, %v1067
        %v1111 = vmul.f32 %v871, %v1077
        %v1112 = vmul.f32 %v872, %v1087
        %v1113 = vmul.f32 %v873, %v1097
        %v1114 = vld [vmem:[%s5] sm:$0xff]
        %v1115 = vld [vmem:[%s5 + $0x8] sm:$0xff]
        %v1116 = vld [vmem:[%s5 + $0x10] sm:$0xff]
        %v1117 = vld [vmem:[%s5 + $0x18] sm:$0xff]
        %v1118 = vld [vmem:[%s5 + $0x20] sm:$0xff]
        %v1119 = vld [vmem:[%s5 + $0x28] sm:$0xff]
        %v1120 = vld [vmem:[%s5 + $0x30] sm:$0xff]
        %v1121 = vld [vmem:[%s5 + $0x38] sm:$0xff]
        %v1122 = vld [vmem:[%s5 + $0x40] sm:$0xff]
        %v1123 = vld [vmem:[%s5 + $0x48] sm:$0xff]
        %v1124 = vld [vmem:[%s5 + $0x50] sm:$0xff]
        %v1125 = vld [vmem:[%s5 + $0x58] sm:$0xff]
        %v1126 = vld [vmem:[%s5 + $0x60] sm:$0xff]
        %v1127 = vld [vmem:[%s5 + $0x68] sm:$0xff]
        %v1128 = vld [vmem:[%s5 + $0x70] sm:$0xff]
        %v1129 = vld [vmem:[%s5 + $0x78] sm:$0xff]
        %v1130 = vld [vmem:[#allocation6] sm:$0xff]
        %v1131 = vld [vmem:[#allocation6 + $0x8] sm:$0xff]
        %v1132 = vld [vmem:[#allocation6 + $0x10] sm:$0xff]
        %v1133 = vld [vmem:[#allocation6 + $0x18] sm:$0xff]
        %v1134 = vld [vmem:[#allocation6 + $0x20] sm:$0xff]
        %v1135 = vld [vmem:[#allocation6 + $0x28] sm:$0xff]
        %v1136 = vld [vmem:[#allocation6 + $0x30] sm:$0xff]
        %v1137 = vld [vmem:[#allocation6 + $0x38] sm:$0xff]
        %v1138 = vld [vmem:[#allocation6 + $0x40] sm:$0xff]
        %v1139 = vld [vmem:[#allocation6 + $0x48] sm:$0xff]
        %v1140 = vld [vmem:[#allocation6 + $0x50] sm:$0xff]
        %v1141 = vld [vmem:[#allocation6 + $0x58] sm:$0xff]
        %v1142 = vld [vmem:[#allocation6 + $0x60] sm:$0xff]
        %v1143 = vld [vmem:[#allocation6 + $0x68] sm:$0xff]
        %v1144 = vld [vmem:[#allocation6 + $0x70] sm:$0xff]
        %v1145 = vld [vmem:[#allocation6 + $0x78] sm:$0xff]
        %v1146 = vld [vmem:[%s6] sm:$0x1]
        %v1147 = vld [vmem:[%s8] sm:$0x1]
        %1148 = vmatpush.msra.mxu0 %v1129
        %1149 = vmatpush.msra.mxu0 %v1128
        %1150 = vmatpush.msra.mxu0 %v1127
        %1151 = vmatpush.msra.mxu0 %v1126
        %1152 = vmatpush.msra.mxu0 %v1125
        %1153 = vmatpush.msra.mxu0 %v1124
        %1154 = vmatpush.msra.mxu0 %v1123
        %1155 = vmatpush.msra.mxu0 %v1122
        %1156 = vmatpush.msra.mxu0 %v1121
        %1157 = vmatpush.msra.mxu0 %v1120
        %1158 = vmatpush.msra.mxu0 %v1119
        %1159 = vmatpush.msra.mxu0 %v1118
        %1160 = vmatpush.msra.mxu0 %v1117
        %1161 = vmatpush.msra.mxu0 %v1116
        %1162 = vmatpush.msra.mxu0 %v1115
        %1163 = vmatpush.msra.mxu0 %v1114
        %1164 = vmatmul.f32.gmra.mxu0 %v1098
        %v1165 = vpop.f32.mrf.mxu0
        %v1166 = vadd.f32 0.0, %v1165
        %1167 = vmatmul.f32.gmra.mxu0 %v1099
        %v1168 = vpop.f32.mrf.mxu0
        %v1169 = vadd.f32 0.0, %v1168
        %1170 = vmatmul.f32.gmra.mxu0 %v1100
        %v1171 = vpop.f32.mrf.mxu0
        %v1172 = vadd.f32 0.0, %v1171
        %1173 = vmatmul.f32.gmra.mxu0 %v1101
        %v1174 = vpop.f32.mrf.mxu0
        %v1175 = vadd.f32 0.0, %v1174
        %1176 = vmatmul.f32.gmra.mxu0 %v1102
        %v1177 = vpop.f32.mrf.mxu0
        %v1178 = vadd.f32 0.0, %v1177
        %1179 = vmatmul.f32.gmra.mxu0 %v1103
        %v1180 = vpop.f32.mrf.mxu0
        %v1181 = vadd.f32 0.0, %v1180
        %1182 = vmatmul.f32.gmra.mxu0 %v1104
        %v1183 = vpop.f32.mrf.mxu0
        %v1184 = vadd.f32 0.0, %v1183
        %1185 = vmatmul.f32.gmra.mxu0 %v1105
        %v1186 = vpop.f32.mrf.mxu0
        %v1187 = vadd.f32 0.0, %v1186
        %1188 = vmatmul.f32.gmra.mxu0 %v1106
        %v1189 = vpop.f32.mrf.mxu0
        %v1190 = vadd.f32 0.0, %v1189
        %1191 = vmatmul.f32.gmra.mxu0 %v1107
        %v1192 = vpop.f32.mrf.mxu0
        %v1193 = vadd.f32 0.0, %v1192
        %1194 = vmatmul.f32.gmra.mxu0 %v1108
        %v1195 = vpop.f32.mrf.mxu0
        %v1196 = vadd.f32 0.0, %v1195
        %1197 = vmatmul.f32.gmra.mxu0 %v1109
        %v1198 = vpop.f32.mrf.mxu0
        %v1199 = vadd.f32 0.0, %v1198
        %1200 = vmatmul.f32.gmra.mxu0 %v1110
        %v1201 = vpop.f32.mrf.mxu0
        %v1202 = vadd.f32 0.0, %v1201
        %1203 = vmatmul.f32.gmra.mxu0 %v1111
        %v1204 = vpop.f32.mrf.mxu0
        %v1205 = vadd.f32 0.0, %v1204
        %1206 = vmatmul.f32.gmra.mxu0 %v1112
        %v1207 = vpop.f32.mrf.mxu0
        %v1208 = vadd.f32 0.0, %v1207
        %1209 = vmatmul.f32.gmra.mxu0 %v1113
        %v1210 = vpop.f32.mrf.mxu0
        %v1211 = vadd.f32 0.0, %v1210
        %1212 = vdwg.mxu0
        %v1213 = vperm.slane %v1146, 0
        %v1214 = vmul.f32 %v1166, %v1213
        %v1215 = vmul.f32 %v1169, %v1213
        %v1216 = vmul.f32 %v1172, %v1213
        %v1217 = vmul.f32 %v1175, %v1213
        %v1218 = vmul.f32 %v1178, %v1213
        %v1219 = vmul.f32 %v1181, %v1213
        %v1220 = vmul.f32 %v1184, %v1213
        %v1221 = vmul.f32 %v1187, %v1213
        %v1222 = vmul.f32 %v1190, %v1213
        %v1223 = vmul.f32 %v1193, %v1213
        %v1224 = vmul.f32 %v1196, %v1213
        %v1225 = vmul.f32 %v1199, %v1213
        %v1226 = vmul.f32 %v1202, %v1213
        %v1227 = vmul.f32 %v1205, %v1213
        %v1228 = vmul.f32 %v1208, %v1213
        %v1229 = vmul.f32 %v1211, %v1213
        %v1230 = vmax.f32 %v1214, 0.0
        %v1231 = vmax.f32 %v1215, 0.0
        %v1232 = vmax.f32 %v1216, 0.0
        %v1233 = vmax.f32 %v1217, 0.0
        %v1234 = vmax.f32 %v1218, 0.0
        %v1235 = vmax.f32 %v1219, 0.0
        %v1236 = vmax.f32 %v1220, 0.0
        %v1237 = vmax.f32 %v1221, 0.0
        %v1238 = vmax.f32 %v1222, 0.0
        %v1239 = vmax.f32 %v1223, 0.0
        %v1240 = vmax.f32 %v1224, 0.0
        %v1241 = vmax.f32 %v1225, 0.0
        %v1242 = vmax.f32 %v1226, 0.0
        %v1243 = vmax.f32 %v1227, 0.0
        %v1244 = vmax.f32 %v1228, 0.0
        %v1245 = vmax.f32 %v1229, 0.0
        %1246 = vmatpush.msra.mxu0 %v1145
        %1247 = vmatpush.msra.mxu0 %v1144
        %1248 = vmatpush.msra.mxu0 %v1143
        %1249 = vmatpush.msra.mxu0 %v1142
        %1250 = vmatpush.msra.mxu0 %v1141
        %1251 = vmatpush.msra.mxu0 %v1140
        %1252 = vmatpush.msra.mxu0 %v1139
        %1253 = vmatpush.msra.mxu0 %v1138
        %1254 = vmatpush.msra.mxu0 %v1137
        %1255 = vmatpush.msra.mxu0 %v1136
        %1256 = vmatpush.msra.mxu0 %v1135
        %1257 = vmatpush.msra.mxu0 %v1134
        %1258 = vmatpush.msra.mxu0 %v1133
        %1259 = vmatpush.msra.mxu0 %v1132
        %1260 = vmatpush.msra.mxu0 %v1131
        %1261 = vmatpush.msra.mxu0 %v1130
        %1262 = vmatmul.f32.gmra.mxu0 %v1230
        %v1263 = vpop.f32.mrf.mxu0
        %v1264 = vadd.f32 0.0, %v1263
        %1265 = vmatmul.f32.gmra.mxu0 %v1231
        %v1266 = vpop.f32.mrf.mxu0
        %v1267 = vadd.f32 0.0, %v1266
        %1268 = vmatmul.f32.gmra.mxu0 %v1232
        %v1269 = vpop.f32.mrf.mxu0
        %v1270 = vadd.f32 0.0, %v1269
        %1271 = vmatmul.f32.gmra.mxu0 %v1233
        %v1272 = vpop.f32.mrf.mxu0
        %v1273 = vadd.f32 0.0, %v1272
        %1274 = vmatmul.f32.gmra.mxu0 %v1234
        %v1275 = vpop.f32.mrf.mxu0
        %v1276 = vadd.f32 0.0, %v1275
        %1277 = vmatmul.f32.gmra.mxu0 %v1235
        %v1278 = vpop.f32.mrf.mxu0
        %v1279 = vadd.f32 0.0, %v1278
        %1280 = vmatmul.f32.gmra.mxu0 %v1236
        %v1281 = vpop.f32.mrf.mxu0
        %v1282 = vadd.f32 0.0, %v1281
        %1283 = vmatmul.f32.gmra.mxu0 %v1237
        %v1284 = vpop.f32.mrf.mxu0
        %v1285 = vadd.f32 0.0, %v1284
        %1286 = vmatmul.f32.gmra.mxu0 %v1238
        %v1287 = vpop.f32.mrf.mxu0
        %v1288 = vadd.f32 0.0, %v1287
        %1289 = vmatmul.f32.gmra.mxu0 %v1239
        %v1290 = vpop.f32.mrf.mxu0
        %v1291 = vadd.f32 0.0, %v1290
        %1292 = vmatmul.f32.gmra.mxu0 %v1240
        %v1293 = vpop.f32.mrf.mxu0
        %v1294 = vadd.f32 0.0, %v1293
        %1295 = vmatmul.f32.gmra.mxu0 %v1241
        %v1296 = vpop.f32.mrf.mxu0
        %v1297 = vadd.f32 0.0, %v1296
        %1298 = vmatmul.f32.gmra.mxu0 %v1242
        %v1299 = vpop.f32.mrf.mxu0
        %v1300 = vadd.f32 0.0, %v1299
        %1301 = vmatmul.f32.gmra.mxu0 %v1243
        %v1302 = vpop.f32.mrf.mxu0
        %v1303 = vadd.f32 0.0, %v1302
        %1304 = vmatmul.f32.gmra.mxu0 %v1244
        %v1305 = vpop.f32.mrf.mxu0
        %v1306 = vadd.f32 0.0, %v1305
        %1307 = vmatmul.f32.gmra.mxu0 %v1245
        %v1308 = vpop.f32.mrf.mxu0
        %v1309 = vadd.f32 0.0, %v1308
        %1310 = vdwg.mxu0
        %v1311 = vmul.f32 %v1264, %v1264
        %v1312 = vmul.f32 %v1267, %v1267
        %v1313 = vmul.f32 %v1270, %v1270
        %v1314 = vmul.f32 %v1273, %v1273
        %v1315 = vmul.f32 %v1276, %v1276
        %v1316 = vmul.f32 %v1279, %v1279
        %v1317 = vmul.f32 %v1282, %v1282
        %v1318 = vmul.f32 %v1285, %v1285
        %v1319 = vmul.f32 %v1288, %v1288
        %v1320 = vmul.f32 %v1291, %v1291
        %v1321 = vmul.f32 %v1294, %v1294
        %v1322 = vmul.f32 %v1297, %v1297
        %v1323 = vmul.f32 %v1300, %v1300
        %v1324 = vmul.f32 %v1303, %v1303
        %v1325 = vmul.f32 %v1306, %v1306
        %v1326 = vmul.f32 %v1309, %v1309
        %1327 = vadd.xlane.f32.xlu0 %v1311
        %v1328 = vpop.xlane.xlu0 %1327
        %1329 = vadd.xlane.f32.xlu0 %v1312
        %v1330 = vpop.xlane.xlu0 %1329
        %1331 = vadd.xlane.f32.xlu0 %v1313
        %v1332 = vpop.xlane.xlu0 %1331
        %1333 = vadd.xlane.f32.xlu0 %v1314
        %v1334 = vpop.xlane.xlu0 %1333
        %1335 = vadd.xlane.f32.xlu0 %v1315
        %v1336 = vpop.xlane.xlu0 %1335
        %1337 = vadd.xlane.f32.xlu0 %v1316
        %v1338 = vpop.xlane.xlu0 %1337
        %1339 = vadd.xlane.f32.xlu0 %v1317
        %v1340 = vpop.xlane.xlu0 %1339
        %1341 = vadd.xlane.f32.xlu0 %v1318
        %v1342 = vpop.xlane.xlu0 %1341
        %1343 = vadd.xlane.f32.xlu0 %v1319
        %v1344 = vpop.xlane.xlu0 %1343
        %1345 = vadd.xlane.f32.xlu0 %v1320
        %v1346 = vpop.xlane.xlu0 %1345
        %1347 = vadd.xlane.f32.xlu0 %v1321
        %v1348 = vpop.xlane.xlu0 %1347
        %1349 = vadd.xlane.f32.xlu0 %v1322
        %v1350 = vpop.xlane.xlu0 %1349
        %1351 = vadd.xlane.f32.xlu0 %v1323
        %v1352 = vpop.xlane.xlu0 %1351
        %1353 = vadd.xlane.f32.xlu0 %v1324
        %v1354 = vpop.xlane.xlu0 %1353
        %1355 = vadd.xlane.f32.xlu0 %v1325
        %v1356 = vpop.xlane.xlu0 %1355
        %1357 = vadd.xlane.f32.xlu0 %v1326
        %v1358 = vpop.xlane.xlu0 %1357
        %v1359 = vadd.f32 %v1328, 1e-08
        %v1360 = vadd.f32 %v1330, 1e-08
        %v1361 = vadd.f32 %v1332, 1e-08
        %v1362 = vadd.f32 %v1334, 1e-08
        %v1363 = vadd.f32 %v1336, 1e-08
        %v1364 = vadd.f32 %v1338, 1e-08
        %v1365 = vadd.f32 %v1340, 1e-08
        %v1366 = vadd.f32 %v1342, 1e-08
        %v1367 = vadd.f32 %v1344, 1e-08
        %v1368 = vadd.f32 %v1346, 1e-08
        %v1369 = vadd.f32 %v1348, 1e-08
        %v1370 = vadd.f32 %v1350, 1e-08
        %v1371 = vadd.f32 %v1352, 1e-08
        %v1372 = vadd.f32 %v1354, 1e-08
        %v1373 = vadd.f32 %v1356, 1e-08
        %v1374 = vadd.f32 %v1358, 1e-08
        %v1375 = vrsqrt.pop %v1359
        %v1376 = vmul.f32 %v1375, %v1359
        %v1377 = vmul.f32 %v1376, %v1375
        %v1378 = vmul.f32 0.5, %v1377
        %v1379 = vsub.f32 1.5, %v1378
        %v1380 = vmul.f32 %v1375, %v1379
        %vm1381 = vweird.f32 %v1359
        %vm1382 = vweird.f32 %v1375
        %vm1383 = vmor %vm1381, %vm1382
        %v1384 = vsel %vm1383, %v1375, %v1380
        %v1385 = vrsqrt.pop %v1360
        %v1386 = vmul.f32 %v1385, %v1360
        %v1387 = vmul.f32 %v1386, %v1385
        %v1388 = vmul.f32 0.5, %v1387
        %v1389 = vsub.f32 1.5, %v1388
        %v1390 = vmul.f32 %v1385, %v1389
        %vm1391 = vweird.f32 %v1360
        %vm1392 = vweird.f32 %v1385
        %vm1393 = vmor %vm1391, %vm1392
        %v1394 = vsel %vm1393, %v1385, %v1390
        %v1395 = vrsqrt.pop %v1361
        %v1396 = vmul.f32 %v1395, %v1361
        %v1397 = vmul.f32 %v1396, %v1395
        %v1398 = vmul.f32 0.5, %v1397
        %v1399 = vsub.f32 1.5, %v1398
        %v1400 = vmul.f32 %v1395, %v1399
        %vm1401 = vweird.f32 %v1361
        %vm1402 = vweird.f32 %v1395
        %vm1403 = vmor %vm1401, %vm1402
        %v1404 = vsel %vm1403, %v1395, %v1400
        %v1405 = vrsqrt.pop %v1362
        %v1406 = vmul.f32 %v1405, %v1362
        %v1407 = vmul.f32 %v1406, %v1405
        %v1408 = vmul.f32 0.5, %v1407
        %v1409 = vsub.f32 1.5, %v1408
        %v1410 = vmul.f32 %v1405, %v1409
        %vm1411 = vweird.f32 %v1362
        %vm1412 = vweird.f32 %v1405
        %vm1413 = vmor %vm1411, %vm1412
        %v1414 = vsel %vm1413, %v1405, %v1410
        %v1415 = vrsqrt.pop %v1363
        %v1416 = vmul.f32 %v1415, %v1363
        %v1417 = vmul.f32 %v1416, %v1415
        %v1418 = vmul.f32 0.5, %v1417
        %v1419 = vsub.f32 1.5, %v1418
        %v1420 = vmul.f32 %v1415, %v1419
        %vm1421 = vweird.f32 %v1363
        %vm1422 = vweird.f32 %v1415
        %vm1423 = vmor %vm1421, %vm1422
        %v1424 = vsel %vm1423, %v1415, %v1420
        %v1425 = vrsqrt.pop %v1364
        %v1426 = vmul.f32 %v1425, %v1364
        %v1427 = vmul.f32 %v1426, %v1425
        %v1428 = vmul.f32 0.5, %v1427
        %v1429 = vsub.f32 1.5, %v1428
        %v1430 = vmul.f32 %v1425, %v1429
        %vm1431 = vweird.f32 %v1364
        %vm1432 = vweird.f32 %v1425
        %vm1433 = vmor %vm1431, %vm1432
        %v1434 = vsel %vm1433, %v1425, %v1430
        %v1435 = vrsqrt.pop %v1365
        %v1436 = vmul.f32 %v1435, %v1365
        %v1437 = vmul.f32 %v1436, %v1435
        %v1438 = vmul.f32 0.5, %v1437
        %v1439 = vsub.f32 1.5, %v1438
        %v1440 = vmul.f32 %v1435, %v1439
        %vm1441 = vweird.f32 %v1365
        %vm1442 = vweird.f32 %v1435
        %vm1443 = vmor %vm1441, %vm1442
        %v1444 = vsel %vm1443, %v1435, %v1440
        %v1445 = vrsqrt.pop %v1366
        %v1446 = vmul.f32 %v1445, %v1366
        %v1447 = vmul.f32 %v1446, %v1445
        %v1448 = vmul.f32 0.5, %v1447
        %v1449 = vsub.f32 1.5, %v1448
        %v1450 = vmul.f32 %v1445, %v1449
        %vm1451 = vweird.f32 %v1366
        %vm1452 = vweird.f32 %v1445
        %vm1453 = vmor %vm1451, %vm1452
        %v1454 = vsel %vm1453, %v1445, %v1450
        %v1455 = vrsqrt.pop %v1367
        %v1456 = vmul.f32 %v1455, %v1367
        %v1457 = vmul.f32 %v1456, %v1455
        %v1458 = vmul.f32 0.5, %v1457
        %v1459 = vsub.f32 1.5, %v1458
        %v1460 = vmul.f32 %v1455, %v1459
        %vm1461 = vweird.f32 %v1367
        %vm1462 = vweird.f32 %v1455
        %vm1463 = vmor %vm1461, %vm1462
        %v1464 = vsel %vm1463, %v1455, %v1460
        %v1465 = vrsqrt.pop %v1368
        %v1466 = vmul.f32 %v1465, %v1368
        %v1467 = vmul.f32 %v1466, %v1465
        %v1468 = vmul.f32 0.5, %v1467
        %v1469 = vsub.f32 1.5, %v1468
        %v1470 = vmul.f32 %v1465, %v1469
        %vm1471 = vweird.f32 %v1368
        %vm1472 = vweird.f32 %v1465
        %vm1473 = vmor %vm1471, %vm1472
        %v1474 = vsel %vm1473, %v1465, %v1470
        %v1475 = vrsqrt.pop %v1369
        %v1476 = vmul.f32 %v1475, %v1369
        %v1477 = vmul.f32 %v1476, %v1475
        %v1478 = vmul.f32 0.5, %v1477
        %v1479 = vsub.f32 1.5, %v1478
        %v1480 = vmul.f32 %v1475, %v1479
        %vm1481 = vweird.f32 %v1369
        %vm1482 = vweird.f32 %v1475
        %vm1483 = vmor %vm1481, %vm1482
        %v1484 = vsel %vm1483, %v1475, %v1480
        %v1485 = vrsqrt.pop %v1370
        %v1486 = vmul.f32 %v1485, %v1370
        %v1487 = vmul.f32 %v1486, %v1485
        %v1488 = vmul.f32 0.5, %v1487
        %v1489 = vsub.f32 1.5, %v1488
        %v1490 = vmul.f32 %v1485, %v1489
        %vm1491 = vweird.f32 %v1370
        %vm1492 = vweird.f32 %v1485
        %vm1493 = vmor %vm1491, %vm1492
        %v1494 = vsel %vm1493, %v1485, %v1490
        %v1495 = vrsqrt.pop %v1371
        %v1496 = vmul.f32 %v1495, %v1371
        %v1497 = vmul.f32 %v1496, %v1495
        %v1498 = vmul.f32 0.5, %v1497
        %v1499 = vsub.f32 1.5, %v1498
        %v1500 = vmul.f32 %v1495, %v1499
        %vm1501 = vweird.f32 %v1371
        %vm1502 = vweird.f32 %v1495
        %vm1503 = vmor %vm1501, %vm1502
        %v1504 = vsel %vm1503, %v1495, %v1500
        %v1505 = vrsqrt.pop %v1372
        %v1506 = vmul.f32 %v1505, %v1372
        %v1507 = vmul.f32 %v1506, %v1505
        %v1508 = vmul.f32 0.5, %v1507
        %v1509 = vsub.f32 1.5, %v1508
        %v1510 = vmul.f32 %v1505, %v1509
        %vm1511 = vweird.f32 %v1372
        %vm1512 = vweird.f32 %v1505
        %vm1513 = vmor %vm1511, %vm1512
        %v1514 = vsel %vm1513, %v1505, %v1510
        %v1515 = vrsqrt.pop %v1373
        %v1516 = vmul.f32 %v1515, %v1373
        %v1517 = vmul.f32 %v1516, %v1515
        %v1518 = vmul.f32 0.5, %v1517
        %v1519 = vsub.f32 1.5, %v1518
        %v1520 = vmul.f32 %v1515, %v1519
        %vm1521 = vweird.f32 %v1373
        %vm1522 = vweird.f32 %v1515
        %vm1523 = vmor %vm1521, %vm1522
        %v1524 = vsel %vm1523, %v1515, %v1520
        %v1525 = vrsqrt.pop %v1374
        %v1526 = vmul.f32 %v1525, %v1374
        %v1527 = vmul.f32 %v1526, %v1525
        %v1528 = vmul.f32 0.5, %v1527
        %v1529 = vsub.f32 1.5, %v1528
        %v1530 = vmul.f32 %v1525, %v1529
        %vm1531 = vweird.f32 %v1374
        %vm1532 = vweird.f32 %v1525
        %vm1533 = vmor %vm1531, %vm1532
        %v1534 = vsel %vm1533, %v1525, %v1530
        %v1535 = vmul.f32 %v1264, %v1384
        %v1536 = vmul.f32 %v1267, %v1394
        %v1537 = vmul.f32 %v1270, %v1404
        %v1538 = vmul.f32 %v1273, %v1414
        %v1539 = vmul.f32 %v1276, %v1424
        %v1540 = vmul.f32 %v1279, %v1434
        %v1541 = vmul.f32 %v1282, %v1444
        %v1542 = vmul.f32 %v1285, %v1454
        %v1543 = vmul.f32 %v1288, %v1464
        %v1544 = vmul.f32 %v1291, %v1474
        %v1545 = vmul.f32 %v1294, %v1484
        %v1546 = vmul.f32 %v1297, %v1494
        %v1547 = vmul.f32 %v1300, %v1504
        %v1548 = vmul.f32 %v1303, %v1514
        %v1549 = vmul.f32 %v1306, %v1524
        %v1550 = vmul.f32 %v1309, %v1534
        %v1551 = vsub.f32 %v1535, %v1098
        %v1552 = vsub.f32 %v1536, %v1099
        %v1553 = vsub.f32 %v1537, %v1100
        %v1554 = vsub.f32 %v1538, %v1101
        %v1555 = vsub.f32 %v1539, %v1102
        %v1556 = vsub.f32 %v1540, %v1103
        %v1557 = vsub.f32 %v1541, %v1104
        %v1558 = vsub.f32 %v1542, %v1105
        %v1559 = vsub.f32 %v1543, %v1106
        %v1560 = vsub.f32 %v1544, %v1107
        %v1561 = vsub.f32 %v1545, %v1108
        %v1562 = vsub.f32 %v1546, %v1109
        %v1563 = vsub.f32 %v1547, %v1110
        %v1564 = vsub.f32 %v1548, %v1111
        %v1565 = vsub.f32 %v1549, %v1112
        %v1566 = vsub.f32 %v1550, %v1113
        %v1567 = vperm.slane %v1147, 0
        %v1568 = vmul.f32 %v1567, %v1551
        %v1569 = vmul.f32 %v1567, %v1552
        %v1570 = vmul.f32 %v1567, %v1553
        %v1571 = vmul.f32 %v1567, %v1554
        %v1572 = vmul.f32 %v1567, %v1555
        %v1573 = vmul.f32 %v1567, %v1556
        %v1574 = vmul.f32 %v1567, %v1557
        %v1575 = vmul.f32 %v1567, %v1558
        %v1576 = vmul.f32 %v1567, %v1559
        %v1577 = vmul.f32 %v1567, %v1560
        %v1578 = vmul.f32 %v1567, %v1561
        %v1579 = vmul.f32 %v1567, %v1562
        %v1580 = vmul.f32 %v1567, %v1563
        %v1581 = vmul.f32 %v1567, %v1564
        %v1582 = vmul.f32 %v1567, %v1565
        %v1583 = vmul.f32 %v1567, %v1566
        %v1584 = vadd.f32 %v1098, %v1568
        %v1585 = vadd.f32 %v1099, %v1569
        %v1586 = vadd.f32 %v1100, %v1570
        %v1587 = vadd.f32 %v1101, %v1571
        %v1588 = vadd.f32 %v1102, %v1572
        %v1589 = vadd.f32 %v1103, %v1573
        %v1590 = vadd.f32 %v1104, %v1574
        %v1591 = vadd.f32 %v1105, %v1575
        %v1592 = vadd.f32 %v1106, %v1576
        %v1593 = vadd.f32 %v1107, %v1577
        %v1594 = vadd.f32 %v1108, %v1578
        %v1595 = vadd.f32 %v1109, %v1579
        %v1596 = vadd.f32 %v1110, %v1580
        %v1597 = vadd.f32 %v1111, %v1581
        %v1598 = vadd.f32 %v1112, %v1582
        %v1599 = vadd.f32 %v1113, %v1583
        %v1600 = vmul.f32 %v1584, %v1584
        %v1601 = vmul.f32 %v1585, %v1585
        %v1602 = vmul.f32 %v1586, %v1586
        %v1603 = vmul.f32 %v1587, %v1587
        %v1604 = vmul.f32 %v1588, %v1588
        %v1605 = vmul.f32 %v1589, %v1589
        %v1606 = vmul.f32 %v1590, %v1590
        %v1607 = vmul.f32 %v1591, %v1591
        %v1608 = vmul.f32 %v1592, %v1592
        %v1609 = vmul.f32 %v1593, %v1593
        %v1610 = vmul.f32 %v1594, %v1594
        %v1611 = vmul.f32 %v1595, %v1595
        %v1612 = vmul.f32 %v1596, %v1596
        %v1613 = vmul.f32 %v1597, %v1597
        %v1614 = vmul.f32 %v1598, %v1598
        %v1615 = vmul.f32 %v1599, %v1599
        %1616 = vadd.xlane.f32.xlu0 %v1600
        %v1617 = vpop.xlane.xlu0 %1616
        %1618 = vadd.xlane.f32.xlu0 %v1601
        %v1619 = vpop.xlane.xlu0 %1618
        %1620 = vadd.xlane.f32.xlu0 %v1602
        %v1621 = vpop.xlane.xlu0 %1620
        %1622 = vadd.xlane.f32.xlu0 %v1603
        %v1623 = vpop.xlane.xlu0 %1622
        %1624 = vadd.xlane.f32.xlu0 %v1604
        %v1625 = vpop.xlane.xlu0 %1624
        %1626 = vadd.xlane.f32.xlu0 %v1605
        %v1627 = vpop.xlane.xlu0 %1626
        %1628 = vadd.xlane.f32.xlu0 %v1606
        %v1629 = vpop.xlane.xlu0 %1628
        %1630 = vadd.xlane.f32.xlu0 %v1607
        %v1631 = vpop.xlane.xlu0 %1630
        %1632 = vadd.xlane.f32.xlu0 %v1608
        %v1633 = vpop.xlane.xlu0 %1632
        %1634 = vadd.xlane.f32.xlu0 %v1609
        %v1635 = vpop.xlane.xlu0 %1634
        %1636 = vadd.xlane.f32.xlu0 %v1610
        %v1637 = vpop.xlane.xlu0 %1636
        %1638 = vadd.xlane.f32.xlu0 %v1611
        %v1639 = vpop.xlane.xlu0 %1638
        %1640 = vadd.xlane.f32.xlu0 %v1612
        %v1641 = vpop.xlane.xlu0 %1640
        %1642 = vadd.xlane.f32.xlu0 %v1613
        %v1643 = vpop.xlane.xlu0 %1642
        %1644 = vadd.xlane.f32.xlu0 %v1614
        %v1645 = vpop.xlane.xlu0 %1644
        %1646 = vadd.xlane.f32.xlu0 %v1615
        %v1647 = vpop.xlane.xlu0 %1646
        %v1648 = vadd.f32 %v1617, 1e-08
        %v1649 = vadd.f32 %v1619, 1e-08
        %v1650 = vadd.f32 %v1621, 1e-08
        %v1651 = vadd.f32 %v1623, 1e-08
        %v1652 = vadd.f32 %v1625, 1e-08
        %v1653 = vadd.f32 %v1627, 1e-08
        %v1654 = vadd.f32 %v1629, 1e-08
        %v1655 = vadd.f32 %v1631, 1e-08
        %v1656 = vadd.f32 %v1633, 1e-08
        %v1657 = vadd.f32 %v1635, 1e-08
        %v1658 = vadd.f32 %v1637, 1e-08
        %v1659 = vadd.f32 %v1639, 1e-08
        %v1660 = vadd.f32 %v1641, 1e-08
        %v1661 = vadd.f32 %v1643, 1e-08
        %v1662 = vadd.f32 %v1645, 1e-08
        %v1663 = vadd.f32 %v1647, 1e-08
        %v1664 = vrsqrt.pop %v1648
        %v1665 = vmul.f32 %v1664, %v1648
        %v1666 = vmul.f32 %v1665, %v1664
        %v1667 = vmul.f32 0.5, %v1666
        %v1668 = vsub.f32 1.5, %v1667
        %v1669 = vmul.f32 %v1664, %v1668
        %vm1670 = vweird.f32 %v1648
        %vm1671 = vweird.f32 %v1664
        %vm1672 = vmor %vm1670, %vm1671
        %v1673 = vsel %vm1672, %v1664, %v1669
        %v1674 = vrsqrt.pop %v1649
        %v1675 = vmul.f32 %v1674, %v1649
        %v1676 = vmul.f32 %v1675, %v1674
        %v1677 = vmul.f32 0.5, %v1676
        %v1678 = vsub.f32 1.5, %v1677
        %v1679 = vmul.f32 %v1674, %v1678
        %vm1680 = vweird.f32 %v1649
        %vm1681 = vweird.f32 %v1674
        %vm1682 = vmor %vm1680, %vm1681
        %v1683 = vsel %vm1682, %v1674, %v1679
        %v1684 = vrsqrt.pop %v1650
        %v1685 = vmul.f32 %v1684, %v1650
        %v1686 = vmul.f32 %v1685, %v1684
        %v1687 = vmul.f32 0.5, %v1686
        %v1688 = vsub.f32 1.5, %v1687
        %v1689 = vmul.f32 %v1684, %v1688
        %vm1690 = vweird.f32 %v1650
        %vm1691 = vweird.f32 %v1684
        %vm1692 = vmor %vm1690, %vm1691
        %v1693 = vsel %vm1692, %v1684, %v1689
        %v1694 = vrsqrt.pop %v1651
        %v1695 = vmul.f32 %v1694, %v1651
        %v1696 = vmul.f32 %v1695, %v1694
        %v1697 = vmul.f32 0.5, %v1696
        %v1698 = vsub.f32 1.5, %v1697
        %v1699 = vmul.f32 %v1694, %v1698
        %vm1700 = vweird.f32 %v1651
        %vm1701 = vweird.f32 %v1694
        %vm1702 = vmor %vm1700, %vm1701
        %v1703 = vsel %vm1702, %v1694, %v1699
        %v1704 = vrsqrt.pop %v1652
        %v1705 = vmul.f32 %v1704, %v1652
        %v1706 = vmul.f32 %v1705, %v1704
        %v1707 = vmul.f32 0.5, %v1706
        %v1708 = vsub.f32 1.5, %v1707
        %v1709 = vmul.f32 %v1704, %v1708
        %vm1710 = vweird.f32 %v1652
        %vm1711 = vweird.f32 %v1704
        %vm1712 = vmor %vm1710, %vm1711
        %v1713 = vsel %vm1712, %v1704, %v1709
        %v1714 = vrsqrt.pop %v1653
        %v1715 = vmul.f32 %v1714, %v1653
        %v1716 = vmul.f32 %v1715, %v1714
        %v1717 = vmul.f32 0.5, %v1716
        %v1718 = vsub.f32 1.5, %v1717
        %v1719 = vmul.f32 %v1714, %v1718
        %vm1720 = vweird.f32 %v1653
        %vm1721 = vweird.f32 %v1714
        %vm1722 = vmor %vm1720, %vm1721
        %v1723 = vsel %vm1722, %v1714, %v1719
        %v1724 = vrsqrt.pop %v1654
        %v1725 = vmul.f32 %v1724, %v1654
        %v1726 = vmul.f32 %v1725, %v1724
        %v1727 = vmul.f32 0.5, %v1726
        %v1728 = vsub.f32 1.5, %v1727
        %v1729 = vmul.f32 %v1724, %v1728
        %vm1730 = vweird.f32 %v1654
        %vm1731 = vweird.f32 %v1724
        %vm1732 = vmor %vm1730, %vm1731
        %v1733 = vsel %vm1732, %v1724, %v1729
        %v1734 = vrsqrt.pop %v1655
        %v1735 = vmul.f32 %v1734, %v1655
        %v1736 = vmul.f32 %v1735, %v1734
        %v1737 = vmul.f32 0.5, %v1736
        %v1738 = vsub.f32 1.5, %v1737
        %v1739 = vmul.f32 %v1734, %v1738
        %vm1740 = vweird.f32 %v1655
        %vm1741 = vweird.f32 %v1734
        %vm1742 = vmor %vm1740, %vm1741
        %v1743 = vsel %vm1742, %v1734, %v1739
        %v1744 = vrsqrt.pop %v1656
        %v1745 = vmul.f32 %v1744, %v1656
        %v1746 = vmul.f32 %v1745, %v1744
        %v1747 = vmul.f32 0.5, %v1746
        %v1748 = vsub.f32 1.5, %v1747
        %v1749 = vmul.f32 %v1744, %v1748
        %vm1750 = vweird.f32 %v1656
        %vm1751 = vweird.f32 %v1744
        %vm1752 = vmor %vm1750, %vm1751
        %v1753 = vsel %vm1752, %v1744, %v1749
        %v1754 = vrsqrt.pop %v1657
        %v1755 = vmul.f32 %v1754, %v1657
        %v1756 = vmul.f32 %v1755, %v1754
        %v1757 = vmul.f32 0.5, %v1756
        %v1758 = vsub.f32 1.5, %v1757
        %v1759 = vmul.f32 %v1754, %v1758
        %vm1760 = vweird.f32 %v1657
        %vm1761 = vweird.f32 %v1754
        %vm1762 = vmor %vm1760, %vm1761
        %v1763 = vsel %vm1762, %v1754, %v1759
        %v1764 = vrsqrt.pop %v1658
        %v1765 = vmul.f32 %v1764, %v1658
        %v1766 = vmul.f32 %v1765, %v1764
        %v1767 = vmul.f32 0.5, %v1766
        %v1768 = vsub.f32 1.5, %v1767
        %v1769 = vmul.f32 %v1764, %v1768
        %vm1770 = vweird.f32 %v1658
        %vm1771 = vweird.f32 %v1764
        %vm1772 = vmor %vm1770, %vm1771
        %v1773 = vsel %vm1772, %v1764, %v1769
        %v1774 = vrsqrt.pop %v1659
        %v1775 = vmul.f32 %v1774, %v1659
        %v1776 = vmul.f32 %v1775, %v1774
        %v1777 = vmul.f32 0.5, %v1776
        %v1778 = vsub.f32 1.5, %v1777
        %v1779 = vmul.f32 %v1774, %v1778
        %vm1780 = vweird.f32 %v1659
        %vm1781 = vweird.f32 %v1774
        %vm1782 = vmor %vm1780, %vm1781
        %v1783 = vsel %vm1782, %v1774, %v1779
        %v1784 = vrsqrt.pop %v1660
        %v1785 = vmul.f32 %v1784, %v1660
        %v1786 = vmul.f32 %v1785, %v1784
        %v1787 = vmul.f32 0.5, %v1786
        %v1788 = vsub.f32 1.5, %v1787
        %v1789 = vmul.f32 %v1784, %v1788
        %vm1790 = vweird.f32 %v1660
        %vm1791 = vweird.f32 %v1784
        %vm1792 = vmor %vm1790, %vm1791
        %v1793 = vsel %vm1792, %v1784, %v1789
        %v1794 = vrsqrt.pop %v1661
        %v1795 = vmul.f32 %v1794, %v1661
        %v1796 = vmul.f32 %v1795, %v1794
        %v1797 = vmul.f32 0.5, %v1796
        %v1798 = vsub.f32 1.5, %v1797
        %v1799 = vmul.f32 %v1794, %v1798
        %vm1800 = vweird.f32 %v1661
        %vm1801 = vweird.f32 %v1794
        %vm1802 = vmor %vm1800, %vm1801
        %v1803 = vsel %vm1802, %v1794, %v1799
        %v1804 = vrsqrt.pop %v1662
        %v1805 = vmul.f32 %v1804, %v1662
        %v1806 = vmul.f32 %v1805, %v1804
        %v1807 = vmul.f32 0.5, %v1806
        %v1808 = vsub.f32 1.5, %v1807
        %v1809 = vmul.f32 %v1804, %v1808
        %vm1810 = vweird.f32 %v1662
        %vm1811 = vweird.f32 %v1804
        %vm1812 = vmor %vm1810, %vm1811
        %v1813 = vsel %vm1812, %v1804, %v1809
        %v1814 = vrsqrt.pop %v1663
        %v1815 = vmul.f32 %v1814, %v1663
        %v1816 = vmul.f32 %v1815, %v1814
        %v1817 = vmul.f32 0.5, %v1816
        %v1818 = vsub.f32 1.5, %v1817
        %v1819 = vmul.f32 %v1814, %v1818
        %vm1820 = vweird.f32 %v1663
        %vm1821 = vweird.f32 %v1814
        %vm1822 = vmor %vm1820, %vm1821
        %v1823 = vsel %vm1822, %v1814, %v1819
        %v1824 = vmul.f32 %v1584, %v1673
        %v1825 = vmul.f32 %v1585, %v1683
        %v1826 = vmul.f32 %v1586, %v1693
        %v1827 = vmul.f32 %v1587, %v1703
        %v1828 = vmul.f32 %v1588, %v1713
        %v1829 = vmul.f32 %v1589, %v1723
        %v1830 = vmul.f32 %v1590, %v1733
        %v1831 = vmul.f32 %v1591, %v1743
        %v1832 = vmul.f32 %v1592, %v1753
        %v1833 = vmul.f32 %v1593, %v1763
        %v1834 = vmul.f32 %v1594, %v1773
        %v1835 = vmul.f32 %v1595, %v1783
        %v1836 = vmul.f32 %v1596, %v1793
        %v1837 = vmul.f32 %v1597, %v1803
        %v1838 = vmul.f32 %v1598, %v1813
        %v1839 = vmul.f32 %v1599, %v1823
        %s1840 = scalar_lea.vmem %s5, 128
        %v1841 = vld [vmem:[%s1840] sm:$0xff]
        %v1842 = vld [vmem:[%s1840 + $0x8] sm:$0xff]
        %v1843 = vld [vmem:[%s1840 + $0x10] sm:$0xff]
        %v1844 = vld [vmem:[%s1840 + $0x18] sm:$0xff]
        %v1845 = vld [vmem:[%s1840 + $0x20] sm:$0xff]
        %v1846 = vld [vmem:[%s1840 + $0x28] sm:$0xff]
        %v1847 = vld [vmem:[%s1840 + $0x30] sm:$0xff]
        %v1848 = vld [vmem:[%s1840 + $0x38] sm:$0xff]
        %v1849 = vld [vmem:[%s1840 + $0x40] sm:$0xff]
        %v1850 = vld [vmem:[%s1840 + $0x48] sm:$0xff]
        %v1851 = vld [vmem:[%s1840 + $0x50] sm:$0xff]
        %v1852 = vld [vmem:[%s1840 + $0x58] sm:$0xff]
        %v1853 = vld [vmem:[%s1840 + $0x60] sm:$0xff]
        %v1854 = vld [vmem:[%s1840 + $0x68] sm:$0xff]
        %v1855 = vld [vmem:[%s1840 + $0x70] sm:$0xff]
        %v1856 = vld [vmem:[%s1840 + $0x78] sm:$0xff]
        %s1857 = scalar_lea.vmem [#allocation6], 128
        %v1858 = vld [vmem:[%s1857] sm:$0xff]
        %v1859 = vld [vmem:[%s1857 + $0x8] sm:$0xff]
        %v1860 = vld [vmem:[%s1857 + $0x10] sm:$0xff]
        %v1861 = vld [vmem:[%s1857 + $0x18] sm:$0xff]
        %v1862 = vld [vmem:[%s1857 + $0x20] sm:$0xff]
        %v1863 = vld [vmem:[%s1857 + $0x28] sm:$0xff]
        %v1864 = vld [vmem:[%s1857 + $0x30] sm:$0xff]
        %v1865 = vld [vmem:[%s1857 + $0x38] sm:$0xff]
        %v1866 = vld [vmem:[%s1857 + $0x40] sm:$0xff]
        %v1867 = vld [vmem:[%s1857 + $0x48] sm:$0xff]
        %v1868 = vld [vmem:[%s1857 + $0x50] sm:$0xff]
        %v1869 = vld [vmem:[%s1857 + $0x58] sm:$0xff]
        %v1870 = vld [vmem:[%s1857 + $0x60] sm:$0xff]
        %v1871 = vld [vmem:[%s1857 + $0x68] sm:$0xff]
        %v1872 = vld [vmem:[%s1857 + $0x70] sm:$0xff]
        %v1873 = vld [vmem:[%s1857 + $0x78] sm:$0xff]
        %v1874 = vld [vmem:[%s6 + $0x1] sm:$0x1]
        %v1875 = vld [vmem:[%s8 + $0x1] sm:$0x1]
        %1876 = vmatpush.msra.mxu0 %v1856
        %1877 = vmatpush.msra.mxu0 %v1855
        %1878 = vmatpush.msra.mxu0 %v1854
        %1879 = vmatpush.msra.mxu0 %v1853
        %1880 = vmatpush.msra.mxu0 %v1852
        %1881 = vmatpush.msra.mxu0 %v1851
        %1882 = vmatpush.msra.mxu0 %v1850
        %1883 = vmatpush.msra.mxu0 %v1849
        %1884 = vmatpush.msra.mxu0 %v1848
        %1885 = vmatpush.msra.mxu0 %v1847
        %1886 = vmatpush.msra.mxu0 %v1846
        %1887 = vmatpush.msra.mxu0 %v1845
        %1888 = vmatpush.msra.mxu0 %v1844
        %1889 = vmatpush.msra.mxu0 %v1843
        %1890 = vmatpush.msra.mxu0 %v1842
        %1891 = vmatpush.msra.mxu0 %v1841
        %1892 = vmatmul.f32.gmra.mxu0 %v1824
        %v1893 = vpop.f32.mrf.mxu0
        %v1894 = vadd.f32 0.0, %v1893
        %1895 = vmatmul.f32.gmra.mxu0 %v1825
        %v1896 = vpop.f32.mrf.mxu0
        %v1897 = vadd.f32 0.0, %v1896
        %1898 = vmatmul.f32.gmra.mxu0 %v1826
        %v1899 = vpop.f32.mrf.mxu0
        %v1900 = vadd.f32 0.0, %v1899
        %1901 = vmatmul.f32.gmra.mxu0 %v1827
        %v1902 = vpop.f32.mrf.mxu0
        %v1903 = vadd.f32 0.0, %v1902
        %1904 = vmatmul.f32.gmra.mxu0 %v1828
        %v1905 = vpop.f32.mrf.mxu0
        %v1906 = vadd.f32 0.0, %v1905
        %1907 = vmatmul.f32.gmra.mxu0 %v1829
        %v1908 = vpop.f32.mrf.mxu0
        %v1909 = vadd.f32 0.0, %v1908
        %1910 = vmatmul.f32.gmra.mxu0 %v1830
        %v1911 = vpop.f32.mrf.mxu0
        %v1912 = vadd.f32 0.0, %v1911
        %1913 = vmatmul.f32.gmra.mxu0 %v1831
        %v1914 = vpop.f32.mrf.mxu0
        %v1915 = vadd.f32 0.0, %v1914
        %1916 = vmatmul.f32.gmra.mxu0 %v1832
        %v1917 = vpop.f32.mrf.mxu0
        %v1918 = vadd.f32 0.0, %v1917
        %1919 = vmatmul.f32.gmra.mxu0 %v1833
        %v1920 = vpop.f32.mrf.mxu0
        %v1921 = vadd.f32 0.0, %v1920
        %1922 = vmatmul.f32.gmra.mxu0 %v1834
        %v1923 = vpop.f32.mrf.mxu0
        %v1924 = vadd.f32 0.0, %v1923
        %1925 = vmatmul.f32.gmra.mxu0 %v1835
        %v1926 = vpop.f32.mrf.mxu0
        %v1927 = vadd.f32 0.0, %v1926
        %1928 = vmatmul.f32.gmra.mxu0 %v1836
        %v1929 = vpop.f32.mrf.mxu0
        %v1930 = vadd.f32 0.0, %v1929
        %1931 = vmatmul.f32.gmra.mxu0 %v1837
        %v1932 = vpop.f32.mrf.mxu0
        %v1933 = vadd.f32 0.0, %v1932
        %1934 = vmatmul.f32.gmra.mxu0 %v1838
        %v1935 = vpop.f32.mrf.mxu0
        %v1936 = vadd.f32 0.0, %v1935
        %1937 = vmatmul.f32.gmra.mxu0 %v1839
        %v1938 = vpop.f32.mrf.mxu0
        %v1939 = vadd.f32 0.0, %v1938
        %1940 = vdwg.mxu0
        %v1941 = vperm.slane %v1874, 0
        %v1942 = vmul.f32 %v1894, %v1941
        %v1943 = vmul.f32 %v1897, %v1941
        %v1944 = vmul.f32 %v1900, %v1941
        %v1945 = vmul.f32 %v1903, %v1941
        %v1946 = vmul.f32 %v1906, %v1941
        %v1947 = vmul.f32 %v1909, %v1941
        %v1948 = vmul.f32 %v1912, %v1941
        %v1949 = vmul.f32 %v1915, %v1941
        %v1950 = vmul.f32 %v1918, %v1941
        %v1951 = vmul.f32 %v1921, %v1941
        %v1952 = vmul.f32 %v1924, %v1941
        %v1953 = vmul.f32 %v1927, %v1941
        %v1954 = vmul.f32 %v1930, %v1941
        %v1955 = vmul.f32 %v1933, %v1941
        %v1956 = vmul.f32 %v1936, %v1941
        %v1957 = vmul.f32 %v1939, %v1941
        %v1958 = vmax.f32 %v1942, 0.0
        %v1959 = vmax.f32 %v1943, 0.0
        %v1960 = vmax.f32 %v1944, 0.0
        %v1961 = vmax.f32 %v1945, 0.0
        %v1962 = vmax.f32 %v1946, 0.0
        %v1963 = vmax.f32 %v1947, 0.0
        %v1964 = vmax.f32 %v1948, 0.0
        %v1965 = vmax.f32 %v1949, 0.0
        %v1966 = vmax.f32 %v1950, 0.0
        %v1967 = vmax.f32 %v1951, 0.0
        %v1968 = vmax.f32 %v1952, 0.0
        %v1969 = vmax.f32 %v1953, 0.0
        %v1970 = vmax.f32 %v1954, 0.0
        %v1971 = vmax.f32 %v1955, 0.0
        %v1972 = vmax.f32 %v1956, 0.0
        %v1973 = vmax.f32 %v1957, 0.0
        %1974 = vmatpush.msra.mxu0 %v1873
        %1975 = vmatpush.msra.mxu0 %v1872
        %1976 = vmatpush.msra.mxu0 %v1871
        %1977 = vmatpush.msra.mxu0 %v1870
        %1978 = vmatpush.msra.mxu0 %v1869
        %1979 = vmatpush.msra.mxu0 %v1868
        %1980 = vmatpush.msra.mxu0 %v1867
        %1981 = vmatpush.msra.mxu0 %v1866
        %1982 = vmatpush.msra.mxu0 %v1865
        %1983 = vmatpush.msra.mxu0 %v1864
        %1984 = vmatpush.msra.mxu0 %v1863
        %1985 = vmatpush.msra.mxu0 %v1862
        %1986 = vmatpush.msra.mxu0 %v1861
        %1987 = vmatpush.msra.mxu0 %v1860
        %1988 = vmatpush.msra.mxu0 %v1859
        %1989 = vmatpush.msra.mxu0 %v1858
        %1990 = vmatmul.f32.gmra.mxu0 %v1958
        %v1991 = vpop.f32.mrf.mxu0
        %v1992 = vadd.f32 0.0, %v1991
        %1993 = vmatmul.f32.gmra.mxu0 %v1959
        %v1994 = vpop.f32.mrf.mxu0
        %v1995 = vadd.f32 0.0, %v1994
        %1996 = vmatmul.f32.gmra.mxu0 %v1960
        %v1997 = vpop.f32.mrf.mxu0
        %v1998 = vadd.f32 0.0, %v1997
        %1999 = vmatmul.f32.gmra.mxu0 %v1961
        %v2000 = vpop.f32.mrf.mxu0
        %v2001 = vadd.f32 0.0, %v2000
        %2002 = vmatmul.f32.gmra.mxu0 %v1962
        %v2003 = vpop.f32.mrf.mxu0
        %v2004 = vadd.f32 0.0, %v2003
        %2005 = vmatmul.f32.gmra.mxu0 %v1963
        %v2006 = vpop.f32.mrf.mxu0
        %v2007 = vadd.f32 0.0, %v2006
        %2008 = vmatmul.f32.gmra.mxu0 %v1964
        %v2009 = vpop.f32.mrf.mxu0
        %v2010 = vadd.f32 0.0, %v2009
        %2011 = vmatmul.f32.gmra.mxu0 %v1965
        %v2012 = vpop.f32.mrf.mxu0
        %v2013 = vadd.f32 0.0, %v2012
        %2014 = vmatmul.f32.gmra.mxu0 %v1966
        %v2015 = vpop.f32.mrf.mxu0
        %v2016 = vadd.f32 0.0, %v2015
        %2017 = vmatmul.f32.gmra.mxu0 %v1967
        %v2018 = vpop.f32.mrf.mxu0
        %v2019 = vadd.f32 0.0, %v2018
        %2020 = vmatmul.f32.gmra.mxu0 %v1968
        %v2021 = vpop.f32.mrf.mxu0
        %v2022 = vadd.f32 0.0, %v2021
        %2023 = vmatmul.f32.gmra.mxu0 %v1969
        %v2024 = vpop.f32.mrf.mxu0
        %v2025 = vadd.f32 0.0, %v2024
        %2026 = vmatmul.f32.gmra.mxu0 %v1970
        %v2027 = vpop.f32.mrf.mxu0
        %v2028 = vadd.f32 0.0, %v2027
        %2029 = vmatmul.f32.gmra.mxu0 %v1971
        %v2030 = vpop.f32.mrf.mxu0
        %v2031 = vadd.f32 0.0, %v2030
        %2032 = vmatmul.f32.gmra.mxu0 %v1972
        %v2033 = vpop.f32.mrf.mxu0
        %v2034 = vadd.f32 0.0, %v2033
        %2035 = vmatmul.f32.gmra.mxu0 %v1973
        %v2036 = vpop.f32.mrf.mxu0
        %v2037 = vadd.f32 0.0, %v2036
        %2038 = vdwg.mxu0
        %v2039 = vmul.f32 %v1992, %v1992
        %v2040 = vmul.f32 %v1995, %v1995
        %v2041 = vmul.f32 %v1998, %v1998
        %v2042 = vmul.f32 %v2001, %v2001
        %v2043 = vmul.f32 %v2004, %v2004
        %v2044 = vmul.f32 %v2007, %v2007
        %v2045 = vmul.f32 %v2010, %v2010
        %v2046 = vmul.f32 %v2013, %v2013
        %v2047 = vmul.f32 %v2016, %v2016
        %v2048 = vmul.f32 %v2019, %v2019
        %v2049 = vmul.f32 %v2022, %v2022
        %v2050 = vmul.f32 %v2025, %v2025
        %v2051 = vmul.f32 %v2028, %v2028
        %v2052 = vmul.f32 %v2031, %v2031
        %v2053 = vmul.f32 %v2034, %v2034
        %v2054 = vmul.f32 %v2037, %v2037
        %2055 = vadd.xlane.f32.xlu0 %v2039
        %v2056 = vpop.xlane.xlu0 %2055
        %2057 = vadd.xlane.f32.xlu0 %v2040
        %v2058 = vpop.xlane.xlu0 %2057
        %2059 = vadd.xlane.f32.xlu0 %v2041
        %v2060 = vpop.xlane.xlu0 %2059
        %2061 = vadd.xlane.f32.xlu0 %v2042
        %v2062 = vpop.xlane.xlu0 %2061
        %2063 = vadd.xlane.f32.xlu0 %v2043
        %v2064 = vpop.xlane.xlu0 %2063
        %2065 = vadd.xlane.f32.xlu0 %v2044
        %v2066 = vpop.xlane.xlu0 %2065
        %2067 = vadd.xlane.f32.xlu0 %v2045
        %v2068 = vpop.xlane.xlu0 %2067
        %2069 = vadd.xlane.f32.xlu0 %v2046
        %v2070 = vpop.xlane.xlu0 %2069
        %2071 = vadd.xlane.f32.xlu0 %v2047
        %v2072 = vpop.xlane.xlu0 %2071
        %2073 = vadd.xlane.f32.xlu0 %v2048
        %v2074 = vpop.xlane.xlu0 %2073
        %2075 = vadd.xlane.f32.xlu0 %v2049
        %v2076 = vpop.xlane.xlu0 %2075
        %2077 = vadd.xlane.f32.xlu0 %v2050
        %v2078 = vpop.xlane.xlu0 %2077
        %2079 = vadd.xlane.f32.xlu0 %v2051
        %v2080 = vpop.xlane.xlu0 %2079
        %2081 = vadd.xlane.f32.xlu0 %v2052
        %v2082 = vpop.xlane.xlu0 %2081
        %2083 = vadd.xlane.f32.xlu0 %v2053
        %v2084 = vpop.xlane.xlu0 %2083
        %2085 = vadd.xlane.f32.xlu0 %v2054
        %v2086 = vpop.xlane.xlu0 %2085
        %v2087 = vadd.f32 %v2056, 1e-08
        %v2088 = vadd.f32 %v2058, 1e-08
        %v2089 = vadd.f32 %v2060, 1e-08
        %v2090 = vadd.f32 %v2062, 1e-08
        %v2091 = vadd.f32 %v2064, 1e-08
        %v2092 = vadd.f32 %v2066, 1e-08
        %v2093 = vadd.f32 %v2068, 1e-08
        %v2094 = vadd.f32 %v2070, 1e-08
        %v2095 = vadd.f32 %v2072, 1e-08
        %v2096 = vadd.f32 %v2074, 1e-08
        %v2097 = vadd.f32 %v2076, 1e-08
        %v2098 = vadd.f32 %v2078, 1e-08
        %v2099 = vadd.f32 %v2080, 1e-08
        %v2100 = vadd.f32 %v2082, 1e-08
        %v2101 = vadd.f32 %v2084, 1e-08
        %v2102 = vadd.f32 %v2086, 1e-08
        %v2103 = vrsqrt.pop %v2087
        %v2104 = vmul.f32 %v2103, %v2087
        %v2105 = vmul.f32 %v2104, %v2103
        %v2106 = vmul.f32 0.5, %v2105
        %v2107 = vsub.f32 1.5, %v2106
        %v2108 = vmul.f32 %v2103, %v2107
        %vm2109 = vweird.f32 %v2087
        %vm2110 = vweird.f32 %v2103
        %vm2111 = vmor %vm2109, %vm2110
        %v2112 = vsel %vm2111, %v2103, %v2108
        %v2113 = vrsqrt.pop %v2088
        %v2114 = vmul.f32 %v2113, %v2088
        %v2115 = vmul.f32 %v2114, %v2113
        %v2116 = vmul.f32 0.5, %v2115
        %v2117 = vsub.f32 1.5, %v2116
        %v2118 = vmul.f32 %v2113, %v2117
        %vm2119 = vweird.f32 %v2088
        %vm2120 = vweird.f32 %v2113
        %vm2121 = vmor %vm2119, %vm2120
        %v2122 = vsel %vm2121, %v2113, %v2118
        %v2123 = vrsqrt.pop %v2089
        %v2124 = vmul.f32 %v2123, %v2089
        %v2125 = vmul.f32 %v2124, %v2123
        %v2126 = vmul.f32 0.5, %v2125
        %v2127 = vsub.f32 1.5, %v2126
        %v2128 = vmul.f32 %v2123, %v2127
        %vm2129 = vweird.f32 %v2089
        %vm2130 = vweird.f32 %v2123
        %vm2131 = vmor %vm2129, %vm2130
        %v2132 = vsel %vm2131, %v2123, %v2128
        %v2133 = vrsqrt.pop %v2090
        %v2134 = vmul.f32 %v2133, %v2090
        %v2135 = vmul.f32 %v2134, %v2133
        %v2136 = vmul.f32 0.5, %v2135
        %v2137 = vsub.f32 1.5, %v2136
        %v2138 = vmul.f32 %v2133, %v2137
        %vm2139 = vweird.f32 %v2090
        %vm2140 = vweird.f32 %v2133
        %vm2141 = vmor %vm2139, %vm2140
        %v2142 = vsel %vm2141, %v2133, %v2138
        %v2143 = vrsqrt.pop %v2091
        %v2144 = vmul.f32 %v2143, %v2091
        %v2145 = vmul.f32 %v2144, %v2143
        %v2146 = vmul.f32 0.5, %v2145
        %v2147 = vsub.f32 1.5, %v2146
        %v2148 = vmul.f32 %v2143, %v2147
        %vm2149 = vweird.f32 %v2091
        %vm2150 = vweird.f32 %v2143
        %vm2151 = vmor %vm2149, %vm2150
        %v2152 = vsel %vm2151, %v2143, %v2148
        %v2153 = vrsqrt.pop %v2092
        %v2154 = vmul.f32 %v2153, %v2092
        %v2155 = vmul.f32 %v2154, %v2153
        %v2156 = vmul.f32 0.5, %v2155
        %v2157 = vsub.f32 1.5, %v2156
        %v2158 = vmul.f32 %v2153, %v2157
        %vm2159 = vweird.f32 %v2092
        %vm2160 = vweird.f32 %v2153
        %vm2161 = vmor %vm2159, %vm2160
        %v2162 = vsel %vm2161, %v2153, %v2158
        %v2163 = vrsqrt.pop %v2093
        %v2164 = vmul.f32 %v2163, %v2093
        %v2165 = vmul.f32 %v2164, %v2163
        %v2166 = vmul.f32 0.5, %v2165
        %v2167 = vsub.f32 1.5, %v2166
        %v2168 = vmul.f32 %v2163, %v2167
        %vm2169 = vweird.f32 %v2093
        %vm2170 = vweird.f32 %v2163
        %vm2171 = vmor %vm2169, %vm2170
        %v2172 = vsel %vm2171, %v2163, %v2168
        %v2173 = vrsqrt.pop %v2094
        %v2174 = vmul.f32 %v2173, %v2094
        %v2175 = vmul.f32 %v2174, %v2173
        %v2176 = vmul.f32 0.5, %v2175
        %v2177 = vsub.f32 1.5, %v2176
        %v2178 = vmul.f32 %v2173, %v2177
        %vm2179 = vweird.f32 %v2094
        %vm2180 = vweird.f32 %v2173
        %vm2181 = vmor %vm2179, %vm2180
        %v2182 = vsel %vm2181, %v2173, %v2178
        %v2183 = vrsqrt.pop %v2095
        %v2184 = vmul.f32 %v2183, %v2095
        %v2185 = vmul.f32 %v2184, %v2183
        %v2186 = vmul.f32 0.5, %v2185
        %v2187 = vsub.f32 1.5, %v2186
        %v2188 = vmul.f32 %v2183, %v2187
        %vm2189 = vweird.f32 %v2095
        %vm2190 = vweird.f32 %v2183
        %vm2191 = vmor %vm2189, %vm2190
        %v2192 = vsel %vm2191, %v2183, %v2188
        %v2193 = vrsqrt.pop %v2096
        %v2194 = vmul.f32 %v2193, %v2096
        %v2195 = vmul.f32 %v2194, %v2193
        %v2196 = vmul.f32 0.5, %v2195
        %v2197 = vsub.f32 1.5, %v2196
        %v2198 = vmul.f32 %v2193, %v2197
        %vm2199 = vweird.f32 %v2096
        %vm2200 = vweird.f32 %v2193
        %vm2201 = vmor %vm2199, %vm2200
        %v2202 = vsel %vm2201, %v2193, %v2198
        %v2203 = vrsqrt.pop %v2097
        %v2204 = vmul.f32 %v2203, %v2097
        %v2205 = vmul.f32 %v2204, %v2203
        %v2206 = vmul.f32 0.5, %v2205
        %v2207 = vsub.f32 1.5, %v2206
        %v2208 = vmul.f32 %v2203, %v2207
        %vm2209 = vweird.f32 %v2097
        %vm2210 = vweird.f32 %v2203
        %vm2211 = vmor %vm2209, %vm2210
        %v2212 = vsel %vm2211, %v2203, %v2208
        %v2213 = vrsqrt.pop %v2098
        %v2214 = vmul.f32 %v2213, %v2098
        %v2215 = vmul.f32 %v2214, %v2213
        %v2216 = vmul.f32 0.5, %v2215
        %v2217 = vsub.f32 1.5, %v2216
        %v2218 = vmul.f32 %v2213, %v2217
        %vm2219 = vweird.f32 %v2098
        %vm2220 = vweird.f32 %v2213
        %vm2221 = vmor %vm2219, %vm2220
        %v2222 = vsel %vm2221, %v2213, %v2218
        %v2223 = vrsqrt.pop %v2099
        %v2224 = vmul.f32 %v2223, %v2099
        %v2225 = vmul.f32 %v2224, %v2223
        %v2226 = vmul.f32 0.5, %v2225
        %v2227 = vsub.f32 1.5, %v2226
        %v2228 = vmul.f32 %v2223, %v2227
        %vm2229 = vweird.f32 %v2099
        %vm2230 = vweird.f32 %v2223
        %vm2231 = vmor %vm2229, %vm2230
        %v2232 = vsel %vm2231, %v2223, %v2228
        %v2233 = vrsqrt.pop %v2100
        %v2234 = vmul.f32 %v2233, %v2100
        %v2235 = vmul.f32 %v2234, %v2233
        %v2236 = vmul.f32 0.5, %v2235
        %v2237 = vsub.f32 1.5, %v2236
        %v2238 = vmul.f32 %v2233, %v2237
        %vm2239 = vweird.f32 %v2100
        %vm2240 = vweird.f32 %v2233
        %vm2241 = vmor %vm2239, %vm2240
        %v2242 = vsel %vm2241, %v2233, %v2238
        %v2243 = vrsqrt.pop %v2101
        %v2244 = vmul.f32 %v2243, %v2101
        %v2245 = vmul.f32 %v2244, %v2243
        %v2246 = vmul.f32 0.5, %v2245
        %v2247 = vsub.f32 1.5, %v2246
        %v2248 = vmul.f32 %v2243, %v2247
        %vm2249 = vweird.f32 %v2101
        %vm2250 = vweird.f32 %v2243
        %vm2251 = vmor %vm2249, %vm2250
        %v2252 = vsel %vm2251, %v2243, %v2248
        %v2253 = vrsqrt.pop %v2102
        %v2254 = vmul.f32 %v2253, %v2102
        %v2255 = vmul.f32 %v2254, %v2253
        %v2256 = vmul.f32 0.5, %v2255
        %v2257 = vsub.f32 1.5, %v2256
        %v2258 = vmul.f32 %v2253, %v2257
        %vm2259 = vweird.f32 %v2102
        %vm2260 = vweird.f32 %v2253
        %vm2261 = vmor %vm2259, %vm2260
        %v2262 = vsel %vm2261, %v2253, %v2258
        %v2263 = vmul.f32 %v1992, %v2112
        %v2264 = vmul.f32 %v1995, %v2122
        %v2265 = vmul.f32 %v1998, %v2132
        %v2266 = vmul.f32 %v2001, %v2142
        %v2267 = vmul.f32 %v2004, %v2152
        %v2268 = vmul.f32 %v2007, %v2162
        %v2269 = vmul.f32 %v2010, %v2172
        %v2270 = vmul.f32 %v2013, %v2182
        %v2271 = vmul.f32 %v2016, %v2192
        %v2272 = vmul.f32 %v2019, %v2202
        %v2273 = vmul.f32 %v2022, %v2212
        %v2274 = vmul.f32 %v2025, %v2222
        %v2275 = vmul.f32 %v2028, %v2232
        %v2276 = vmul.f32 %v2031, %v2242
        %v2277 = vmul.f32 %v2034, %v2252
        %v2278 = vmul.f32 %v2037, %v2262
        %v2279 = vsub.f32 %v2263, %v1824
        %v2280 = vsub.f32 %v2264, %v1825
        %v2281 = vsub.f32 %v2265, %v1826
        %v2282 = vsub.f32 %v2266, %v1827
        %v2283 = vsub.f32 %v2267, %v1828
        %v2284 = vsub.f32 %v2268, %v1829
        %v2285 = vsub.f32 %v2269, %v1830
        %v2286 = vsub.f32 %v2270, %v1831
        %v2287 = vsub.f32 %v2271, %v1832
        %v2288 = vsub.f32 %v2272, %v1833
        %v2289 = vsub.f32 %v2273, %v1834
        %v2290 = vsub.f32 %v2274, %v1835
        %v2291 = vsub.f32 %v2275, %v1836
        %v2292 = vsub.f32 %v2276, %v1837
        %v2293 = vsub.f32 %v2277, %v1838
        %v2294 = vsub.f32 %v2278, %v1839
        %v2295 = vperm.slane %v1875, 0
        %v2296 = vmul.f32 %v2295, %v2279
        %v2297 = vmul.f32 %v2295, %v2280
        %v2298 = vmul.f32 %v2295, %v2281
        %v2299 = vmul.f32 %v2295, %v2282
        %v2300 = vmul.f32 %v2295, %v2283
        %v2301 = vmul.f32 %v2295, %v2284
        %v2302 = vmul.f32 %v2295, %v2285
        %v2303 = vmul.f32 %v2295, %v2286
        %v2304 = vmul.f32 %v2295, %v2287
        %v2305 = vmul.f32 %v2295, %v2288
        %v2306 = vmul.f32 %v2295, %v2289
        %v2307 = vmul.f32 %v2295, %v2290
        %v2308 = vmul.f32 %v2295, %v2291
        %v2309 = vmul.f32 %v2295, %v2292
        %v2310 = vmul.f32 %v2295, %v2293
        %v2311 = vmul.f32 %v2295, %v2294
        %v2312 = vadd.f32 %v1824, %v2296
        %v2313 = vadd.f32 %v1825, %v2297
        %v2314 = vadd.f32 %v1826, %v2298
        %v2315 = vadd.f32 %v1827, %v2299
        %v2316 = vadd.f32 %v1828, %v2300
        %v2317 = vadd.f32 %v1829, %v2301
        %v2318 = vadd.f32 %v1830, %v2302
        %v2319 = vadd.f32 %v1831, %v2303
        %v2320 = vadd.f32 %v1832, %v2304
        %v2321 = vadd.f32 %v1833, %v2305
        %v2322 = vadd.f32 %v1834, %v2306
        %v2323 = vadd.f32 %v1835, %v2307
        %v2324 = vadd.f32 %v1836, %v2308
        %v2325 = vadd.f32 %v1837, %v2309
        %v2326 = vadd.f32 %v1838, %v2310
        %v2327 = vadd.f32 %v1839, %v2311
        %v2328 = vmul.f32 %v2312, %v2312
        %v2329 = vmul.f32 %v2313, %v2313
        %v2330 = vmul.f32 %v2314, %v2314
        %v2331 = vmul.f32 %v2315, %v2315
        %v2332 = vmul.f32 %v2316, %v2316
        %v2333 = vmul.f32 %v2317, %v2317
        %v2334 = vmul.f32 %v2318, %v2318
        %v2335 = vmul.f32 %v2319, %v2319
        %v2336 = vmul.f32 %v2320, %v2320
        %v2337 = vmul.f32 %v2321, %v2321
        %v2338 = vmul.f32 %v2322, %v2322
        %v2339 = vmul.f32 %v2323, %v2323
        %v2340 = vmul.f32 %v2324, %v2324
        %v2341 = vmul.f32 %v2325, %v2325
        %v2342 = vmul.f32 %v2326, %v2326
        %v2343 = vmul.f32 %v2327, %v2327
        %2344 = vadd.xlane.f32.xlu0 %v2328
        %v2345 = vpop.xlane.xlu0 %2344
        %2346 = vadd.xlane.f32.xlu0 %v2329
        %v2347 = vpop.xlane.xlu0 %2346
        %2348 = vadd.xlane.f32.xlu0 %v2330
        %v2349 = vpop.xlane.xlu0 %2348
        %2350 = vadd.xlane.f32.xlu0 %v2331
        %v2351 = vpop.xlane.xlu0 %2350
        %2352 = vadd.xlane.f32.xlu0 %v2332
        %v2353 = vpop.xlane.xlu0 %2352
        %2354 = vadd.xlane.f32.xlu0 %v2333
        %v2355 = vpop.xlane.xlu0 %2354
        %2356 = vadd.xlane.f32.xlu0 %v2334
        %v2357 = vpop.xlane.xlu0 %2356
        %2358 = vadd.xlane.f32.xlu0 %v2335
        %v2359 = vpop.xlane.xlu0 %2358
        %2360 = vadd.xlane.f32.xlu0 %v2336
        %v2361 = vpop.xlane.xlu0 %2360
        %2362 = vadd.xlane.f32.xlu0 %v2337
        %v2363 = vpop.xlane.xlu0 %2362
        %2364 = vadd.xlane.f32.xlu0 %v2338
        %v2365 = vpop.xlane.xlu0 %2364
        %2366 = vadd.xlane.f32.xlu0 %v2339
        %v2367 = vpop.xlane.xlu0 %2366
        %2368 = vadd.xlane.f32.xlu0 %v2340
        %v2369 = vpop.xlane.xlu0 %2368
        %2370 = vadd.xlane.f32.xlu0 %v2341
        %v2371 = vpop.xlane.xlu0 %2370
        %2372 = vadd.xlane.f32.xlu0 %v2342
        %v2373 = vpop.xlane.xlu0 %2372
        %2374 = vadd.xlane.f32.xlu0 %v2343
        %v2375 = vpop.xlane.xlu0 %2374
        %v2376 = vadd.f32 %v2345, 1e-08
        %v2377 = vadd.f32 %v2347, 1e-08
        %v2378 = vadd.f32 %v2349, 1e-08
        %v2379 = vadd.f32 %v2351, 1e-08
        %v2380 = vadd.f32 %v2353, 1e-08
        %v2381 = vadd.f32 %v2355, 1e-08
        %v2382 = vadd.f32 %v2357, 1e-08
        %v2383 = vadd.f32 %v2359, 1e-08
        %v2384 = vadd.f32 %v2361, 1e-08
        %v2385 = vadd.f32 %v2363, 1e-08
        %v2386 = vadd.f32 %v2365, 1e-08
        %v2387 = vadd.f32 %v2367, 1e-08
        %v2388 = vadd.f32 %v2369, 1e-08
        %v2389 = vadd.f32 %v2371, 1e-08
        %v2390 = vadd.f32 %v2373, 1e-08
        %v2391 = vadd.f32 %v2375, 1e-08
        %v2392 = vrsqrt.pop %v2376
        %v2393 = vmul.f32 %v2392, %v2376
        %v2394 = vmul.f32 %v2393, %v2392
        %v2395 = vmul.f32 0.5, %v2394
        %v2396 = vsub.f32 1.5, %v2395
        %v2397 = vmul.f32 %v2392, %v2396
        %vm2398 = vweird.f32 %v2376
        %vm2399 = vweird.f32 %v2392
        %vm2400 = vmor %vm2398, %vm2399
        %v2401 = vsel %vm2400, %v2392, %v2397
        %v2402 = vrsqrt.pop %v2377
        %v2403 = vmul.f32 %v2402, %v2377
        %v2404 = vmul.f32 %v2403, %v2402
        %v2405 = vmul.f32 0.5, %v2404
        %v2406 = vsub.f32 1.5, %v2405
        %v2407 = vmul.f32 %v2402, %v2406
        %vm2408 = vweird.f32 %v2377
        %vm2409 = vweird.f32 %v2402
        %vm2410 = vmor %vm2408, %vm2409
        %v2411 = vsel %vm2410, %v2402, %v2407
        %v2412 = vrsqrt.pop %v2378
        %v2413 = vmul.f32 %v2412, %v2378
        %v2414 = vmul.f32 %v2413, %v2412
        %v2415 = vmul.f32 0.5, %v2414
        %v2416 = vsub.f32 1.5, %v2415
        %v2417 = vmul.f32 %v2412, %v2416
        %vm2418 = vweird.f32 %v2378
        %vm2419 = vweird.f32 %v2412
        %vm2420 = vmor %vm2418, %vm2419
        %v2421 = vsel %vm2420, %v2412, %v2417
        %v2422 = vrsqrt.pop %v2379
        %v2423 = vmul.f32 %v2422, %v2379
        %v2424 = vmul.f32 %v2423, %v2422
        %v2425 = vmul.f32 0.5, %v2424
        %v2426 = vsub.f32 1.5, %v2425
        %v2427 = vmul.f32 %v2422, %v2426
        %vm2428 = vweird.f32 %v2379
        %vm2429 = vweird.f32 %v2422
        %vm2430 = vmor %vm2428, %vm2429
        %v2431 = vsel %vm2430, %v2422, %v2427
        %v2432 = vrsqrt.pop %v2380
        %v2433 = vmul.f32 %v2432, %v2380
        %v2434 = vmul.f32 %v2433, %v2432
        %v2435 = vmul.f32 0.5, %v2434
        %v2436 = vsub.f32 1.5, %v2435
        %v2437 = vmul.f32 %v2432, %v2436
        %vm2438 = vweird.f32 %v2380
        %vm2439 = vweird.f32 %v2432
        %vm2440 = vmor %vm2438, %vm2439
        %v2441 = vsel %vm2440, %v2432, %v2437
        %v2442 = vrsqrt.pop %v2381
        %v2443 = vmul.f32 %v2442, %v2381
        %v2444 = vmul.f32 %v2443, %v2442
        %v2445 = vmul.f32 0.5, %v2444
        %v2446 = vsub.f32 1.5, %v2445
        %v2447 = vmul.f32 %v2442, %v2446
        %vm2448 = vweird.f32 %v2381
        %vm2449 = vweird.f32 %v2442
        %vm2450 = vmor %vm2448, %vm2449
        %v2451 = vsel %vm2450, %v2442, %v2447
        %v2452 = vrsqrt.pop %v2382
        %v2453 = vmul.f32 %v2452, %v2382
        %v2454 = vmul.f32 %v2453, %v2452
        %v2455 = vmul.f32 0.5, %v2454
        %v2456 = vsub.f32 1.5, %v2455
        %v2457 = vmul.f32 %v2452, %v2456
        %vm2458 = vweird.f32 %v2382
        %vm2459 = vweird.f32 %v2452
        %vm2460 = vmor %vm2458, %vm2459
        %v2461 = vsel %vm2460, %v2452, %v2457
        %v2462 = vrsqrt.pop %v2383
        %v2463 = vmul.f32 %v2462, %v2383
        %v2464 = vmul.f32 %v2463, %v2462
        %v2465 = vmul.f32 0.5, %v2464
        %v2466 = vsub.f32 1.5, %v2465
        %v2467 = vmul.f32 %v2462, %v2466
        %vm2468 = vweird.f32 %v2383
        %vm2469 = vweird.f32 %v2462
        %vm2470 = vmor %vm2468, %vm2469
        %v2471 = vsel %vm2470, %v2462, %v2467
        %v2472 = vrsqrt.pop %v2384
        %v2473 = vmul.f32 %v2472, %v2384
        %v2474 = vmul.f32 %v2473, %v2472
        %v2475 = vmul.f32 0.5, %v2474
        %v2476 = vsub.f32 1.5, %v2475
        %v2477 = vmul.f32 %v2472, %v2476
        %vm2478 = vweird.f32 %v2384
        %vm2479 = vweird.f32 %v2472
        %vm2480 = vmor %vm2478, %vm2479
        %v2481 = vsel %vm2480, %v2472, %v2477
        %v2482 = vrsqrt.pop %v2385
        %v2483 = vmul.f32 %v2482, %v2385
        %v2484 = vmul.f32 %v2483, %v2482
        %v2485 = vmul.f32 0.5, %v2484
        %v2486 = vsub.f32 1.5, %v2485
        %v2487 = vmul.f32 %v2482, %v2486
        %vm2488 = vweird.f32 %v2385
        %vm2489 = vweird.f32 %v2482
        %vm2490 = vmor %vm2488, %vm2489
        %v2491 = vsel %vm2490, %v2482, %v2487
        %v2492 = vrsqrt.pop %v2386
        %v2493 = vmul.f32 %v2492, %v2386
        %v2494 = vmul.f32 %v2493, %v2492
        %v2495 = vmul.f32 0.5, %v2494
        %v2496 = vsub.f32 1.5, %v2495
        %v2497 = vmul.f32 %v2492, %v2496
        %vm2498 = vweird.f32 %v2386
        %vm2499 = vweird.f32 %v2492
        %vm2500 = vmor %vm2498, %vm2499
        %v2501 = vsel %vm2500, %v2492, %v2497
        %v2502 = vrsqrt.pop %v2387
        %v2503 = vmul.f32 %v2502, %v2387
        %v2504 = vmul.f32 %v2503, %v2502
        %v2505 = vmul.f32 0.5, %v2504
        %v2506 = vsub.f32 1.5, %v2505
        %v2507 = vmul.f32 %v2502, %v2506
        %vm2508 = vweird.f32 %v2387
        %vm2509 = vweird.f32 %v2502
        %vm2510 = vmor %vm2508, %vm2509
        %v2511 = vsel %vm2510, %v2502, %v2507
        %v2512 = vrsqrt.pop %v2388
        %v2513 = vmul.f32 %v2512, %v2388
        %v2514 = vmul.f32 %v2513, %v2512
        %v2515 = vmul.f32 0.5, %v2514
        %v2516 = vsub.f32 1.5, %v2515
        %v2517 = vmul.f32 %v2512, %v2516
        %vm2518 = vweird.f32 %v2388
        %vm2519 = vweird.f32 %v2512
        %vm2520 = vmor %vm2518, %vm2519
        %v2521 = vsel %vm2520, %v2512, %v2517
        %v2522 = vrsqrt.pop %v2389
        %v2523 = vmul.f32 %v2522, %v2389
        %v2524 = vmul.f32 %v2523, %v2522
        %v2525 = vmul.f32 0.5, %v2524
        %v2526 = vsub.f32 1.5, %v2525
        %v2527 = vmul.f32 %v2522, %v2526
        %vm2528 = vweird.f32 %v2389
        %vm2529 = vweird.f32 %v2522
        %vm2530 = vmor %vm2528, %vm2529
        %v2531 = vsel %vm2530, %v2522, %v2527
        %v2532 = vrsqrt.pop %v2390
        %v2533 = vmul.f32 %v2532, %v2390
        %v2534 = vmul.f32 %v2533, %v2532
        %v2535 = vmul.f32 0.5, %v2534
        %v2536 = vsub.f32 1.5, %v2535
        %v2537 = vmul.f32 %v2532, %v2536
        %vm2538 = vweird.f32 %v2390
        %vm2539 = vweird.f32 %v2532
        %vm2540 = vmor %vm2538, %vm2539
        %v2541 = vsel %vm2540, %v2532, %v2537
        %v2542 = vrsqrt.pop %v2391
        %v2543 = vmul.f32 %v2542, %v2391
        %v2544 = vmul.f32 %v2543, %v2542
        %v2545 = vmul.f32 0.5, %v2544
        %v2546 = vsub.f32 1.5, %v2545
        %v2547 = vmul.f32 %v2542, %v2546
        %vm2548 = vweird.f32 %v2391
        %vm2549 = vweird.f32 %v2542
        %vm2550 = vmor %vm2548, %vm2549
        %v2551 = vsel %vm2550, %v2542, %v2547
        %v2552 = vmul.f32 %v2312, %v2401
        %v2553 = vmul.f32 %v2313, %v2411
        %v2554 = vmul.f32 %v2314, %v2421
        %v2555 = vmul.f32 %v2315, %v2431
        %v2556 = vmul.f32 %v2316, %v2441
        %v2557 = vmul.f32 %v2317, %v2451
        %v2558 = vmul.f32 %v2318, %v2461
        %v2559 = vmul.f32 %v2319, %v2471
        %v2560 = vmul.f32 %v2320, %v2481
        %v2561 = vmul.f32 %v2321, %v2491
        %v2562 = vmul.f32 %v2322, %v2501
        %v2563 = vmul.f32 %v2323, %v2511
        %v2564 = vmul.f32 %v2324, %v2521
        %v2565 = vmul.f32 %v2325, %v2531
        %v2566 = vmul.f32 %v2326, %v2541
        %v2567 = vmul.f32 %v2327, %v2551
        %2568 = vst [vmem:[%s403] sm:$0xff] %v2552
        %2569 = vst [vmem:[%s403 + $0x10] sm:$0xff] %v2553
        %2570 = vst [vmem:[%s403 + $0x20] sm:$0xff] %v2554
        %2571 = vst [vmem:[%s403 + $0x30] sm:$0xff] %v2555
        %2572 = vst [vmem:[%s403 + $0x40] sm:$0xff] %v2556
        %2573 = vst [vmem:[%s403 + $0x50] sm:$0xff] %v2557
        %2574 = vst [vmem:[%s403 + $0x60] sm:$0xff] %v2558
        %2575 = vst [vmem:[%s403 + $0x70] sm:$0xff] %v2559
        %2576 = vst [vmem:[%s403 + $0x80] sm:$0xff] %v2560
        %2577 = vst [vmem:[%s403 + $0x90] sm:$0xff] %v2561
        %2578 = vst [vmem:[%s403 + $0xa0] sm:$0xff] %v2562
        %2579 = vst [vmem:[%s403 + $0xb0] sm:$0xff] %v2563
        %2580 = vst [vmem:[%s403 + $0xc0] sm:$0xff] %v2564
        %2581 = vst [vmem:[%s403 + $0xd0] sm:$0xff] %v2565
        %2582 = vst [vmem:[%s403 + $0xe0] sm:$0xff] %v2566
        %2583 = vst [vmem:[%s403 + $0xf0] sm:$0xff] %v2567
        %v2584 = vld [vmem:[#allocation8] sm:$0xff]
        %v2585 = vld [vmem:[#allocation8 + $0x8] sm:$0xff]
        %v2586 = vld [vmem:[#allocation8 + $0x10] sm:$0xff]
        %v2587 = vld [vmem:[#allocation8 + $0x18] sm:$0xff]
        %v2588 = vld [vmem:[#allocation8 + $0x20] sm:$0xff]
        %v2589 = vld [vmem:[#allocation8 + $0x28] sm:$0xff]
        %v2590 = vld [vmem:[#allocation8 + $0x30] sm:$0xff]
        %v2591 = vld [vmem:[#allocation8 + $0x38] sm:$0xff]
        %v2592 = vld [vmem:[#allocation8 + $0x40] sm:$0xff]
        %v2593 = vld [vmem:[#allocation8 + $0x48] sm:$0xff]
        %v2594 = vld [vmem:[#allocation8 + $0x50] sm:$0xff]
        %v2595 = vld [vmem:[#allocation8 + $0x58] sm:$0xff]
        %v2596 = vld [vmem:[#allocation8 + $0x60] sm:$0xff]
        %v2597 = vld [vmem:[#allocation8 + $0x68] sm:$0xff]
        %v2598 = vld [vmem:[#allocation8 + $0x70] sm:$0xff]
        %v2599 = vld [vmem:[#allocation8 + $0x78] sm:$0xff]
        %2600 = vmatpush.msra.mxu0 %v2599
        %2601 = vmatpush.msra.mxu0 %v2598
        %2602 = vmatpush.msra.mxu0 %v2597
        %2603 = vmatpush.msra.mxu0 %v2596
        %2604 = vmatpush.msra.mxu0 %v2595
        %2605 = vmatpush.msra.mxu0 %v2594
        %2606 = vmatpush.msra.mxu0 %v2593
        %2607 = vmatpush.msra.mxu0 %v2592
        %2608 = vmatpush.msra.mxu0 %v2591
        %2609 = vmatpush.msra.mxu0 %v2590
        %2610 = vmatpush.msra.mxu0 %v2589
        %2611 = vmatpush.msra.mxu0 %v2588
        %2612 = vmatpush.msra.mxu0 %v2587
        %2613 = vmatpush.msra.mxu0 %v2586
        %2614 = vmatpush.msra.mxu0 %v2585
        %2615 = vmatpush.msra.mxu0 %v2584
        %2616 = vmatmul.f32.gmra.mxu0 %v2552
        %v2617 = vpop.f32.mrf.mxu0
        %v2618 = vadd.f32 0.0, %v2617
        %2619 = vmatmul.f32.gmra.mxu0 %v2553
        %v2620 = vpop.f32.mrf.mxu0
        %v2621 = vadd.f32 0.0, %v2620
        %2622 = vmatmul.f32.gmra.mxu0 %v2554
        %v2623 = vpop.f32.mrf.mxu0
        %v2624 = vadd.f32 0.0, %v2623
        %2625 = vmatmul.f32.gmra.mxu0 %v2555
        %v2626 = vpop.f32.mrf.mxu0
        %v2627 = vadd.f32 0.0, %v2626
        %2628 = vmatmul.f32.gmra.mxu0 %v2556
        %v2629 = vpop.f32.mrf.mxu0
        %v2630 = vadd.f32 0.0, %v2629
        %2631 = vmatmul.f32.gmra.mxu0 %v2557
        %v2632 = vpop.f32.mrf.mxu0
        %v2633 = vadd.f32 0.0, %v2632
        %2634 = vmatmul.f32.gmra.mxu0 %v2558
        %v2635 = vpop.f32.mrf.mxu0
        %v2636 = vadd.f32 0.0, %v2635
        %2637 = vmatmul.f32.gmra.mxu0 %v2559
        %v2638 = vpop.f32.mrf.mxu0
        %v2639 = vadd.f32 0.0, %v2638
        %2640 = vmatmul.f32.gmra.mxu0 %v2560
        %v2641 = vpop.f32.mrf.mxu0
        %v2642 = vadd.f32 0.0, %v2641
        %2643 = vmatmul.f32.gmra.mxu0 %v2561
        %v2644 = vpop.f32.mrf.mxu0
        %v2645 = vadd.f32 0.0, %v2644
        %2646 = vmatmul.f32.gmra.mxu0 %v2562
        %v2647 = vpop.f32.mrf.mxu0
        %v2648 = vadd.f32 0.0, %v2647
        %2649 = vmatmul.f32.gmra.mxu0 %v2563
        %v2650 = vpop.f32.mrf.mxu0
        %v2651 = vadd.f32 0.0, %v2650
        %2652 = vmatmul.f32.gmra.mxu0 %v2564
        %v2653 = vpop.f32.mrf.mxu0
        %v2654 = vadd.f32 0.0, %v2653
        %2655 = vmatmul.f32.gmra.mxu0 %v2565
        %v2656 = vpop.f32.mrf.mxu0
        %v2657 = vadd.f32 0.0, %v2656
        %2658 = vmatmul.f32.gmra.mxu0 %v2566
        %v2659 = vpop.f32.mrf.mxu0
        %v2660 = vadd.f32 0.0, %v2659
        %2661 = vmatmul.f32.gmra.mxu0 %v2567
        %v2662 = vpop.f32.mrf.mxu0
        %v2663 = vadd.f32 0.0, %v2662
        %2664 = vdwg.mxu0
        %2665 = vst [vmem:[%s403 + $0x8] sm:$0xff] %v2618
        %2666 = vst [vmem:[%s403 + $0x18] sm:$0xff] %v2621
        %2667 = vst [vmem:[%s403 + $0x28] sm:$0xff] %v2624
        %2668 = vst [vmem:[%s403 + $0x38] sm:$0xff] %v2627
        %2669 = vst [vmem:[%s403 + $0x48] sm:$0xff] %v2630
        %2670 = vst [vmem:[%s403 + $0x58] sm:$0xff] %v2633
        %2671 = vst [vmem:[%s403 + $0x68] sm:$0xff] %v2636
        %2672 = vst [vmem:[%s403 + $0x78] sm:$0xff] %v2639
        %2673 = vst [vmem:[%s403 + $0x88] sm:$0xff] %v2642
        %2674 = vst [vmem:[%s403 + $0x98] sm:$0xff] %v2645
        %2675 = vst [vmem:[%s403 + $0xa8] sm:$0xff] %v2648
        %2676 = vst [vmem:[%s403 + $0xb8] sm:$0xff] %v2651
        %2677 = vst [vmem:[%s403 + $0xc8] sm:$0xff] %v2654
        %2678 = vst [vmem:[%s403 + $0xd8] sm:$0xff] %v2657
        %2679 = vst [vmem:[%s403 + $0xe8] sm:$0xff] %v2660
        %2680 = vst [vmem:[%s403 + $0xf8] sm:$0xff] %v2663
        %s2681 = sand.u32 %s249, 1
        %s2682 = scalar_lea.sflag [#allocation5], %s2681
        %s2683 = sand.u32 %s249, 1
        %s2684 = smul.addr %s2683, 256
        %s2685 = scalar_lea.vmem [#allocation9], %s2684
        // Predicated region
        $region73: #{tpu_custom_call.1} parent=59 // pred_check
          %p2686 = pneg %p259
        $region74: #{tpu_custom_call.1} parent=59 // pred_check_branch
          %2688 = sbr.rel (%p2686) target = $region76
        $region75: #{tpu_custom_call.1} parent=59 // pred_region
          %s2689 = smul.u32 16, %s26
          %2691 = vsyncadd %s2682, 0
          %s2692 = smul.addr %s2689, 2
          %s2693 = smul.addr %s2692, 8
          %s2694 = scalar_lea.hbm %s10, %s2693
          %s2695 = sshll.u32 %s2685, 4
          %s2696 = int_to_ptr.vmem [resolvable:$true] %s2695
          %s2697 = sshll.u32 %s2694, 4
          %s2698 = int_to_ptr.hbm [resolvable:$true] %s2697
          %2703 = dma.vmem_to_hbm [thread:$0]  %s2696, 4096, %s2698, %s2682, 256, 256, 16
        $region76: #{tpu_custom_call.1} parent=59 // pred_fallthru
          _
      $region60: #{tpu_custom_call.1} parent=5 // pred_fallthru
        _
      %p2704 = scmp.le.s32.totalorder 2, %s21
      // Predicated region
      $region77: #{tpu_custom_call.1} parent=5 // pred_check
        %p2705 = pneg %p2704
      $region78: #{tpu_custom_call.1} parent=5 // pred_check_branch
        %2707 = sbr.rel (%p2705) target = $region80
      $region79: #{tpu_custom_call.1} parent=5 // pred_region
        %s2708 = ssub.s32 %s21, 2
        // Predicated region
        $region81: #{tpu_custom_call.1} parent=79 // pred_check
          %p2709 = pneg %p265
        $region82: #{tpu_custom_call.1} parent=79 // pred_check_branch
          %2711 = sbr.rel (%p2709) target = $region84
        $region83: #{tpu_custom_call.1} parent=79 // pred_region
          %s2712 = sand.u32 %s250, 1
          %s2713 = scalar_lea.sflag [#allocation5], %s2712
          %s2714 = sand.u32 %s250, 1
          %s2715 = smul.addr %s2714, 256
          %s2716 = scalar_lea.vmem [#allocation9], %s2715
          %2718 = dma.done %s2713, 4096
        $region84: #{tpu_custom_call.1} parent=79 // pred_fallthru
          _
      $region80: #{tpu_custom_call.1} parent=5 // pred_fallthru
        _
    $region6: #{tpu_custom_call.1} parent=1 // loop_footer
      %s25 = sadd.s32 1, %s21
    $region7: #{tpu_custom_call.1} parent=1 // loop_footer_branch
      %20 = sbr.rel target = $region3
    $region8: #{tpu_custom_call.1} parent=1 // loop_exit
      _
    %2719 = vsyncpa [#allocation4], 1
    %s2720 = scalar_lea.sflag [#allocation4], 1
    %2721 = vsyncpa %s2720, 1
    %2722 = vsyncpa [#allocation7], 1
    %2723 = vsyncpa [#allocation5], 1
    %s2724 = scalar_lea.sflag [#allocation5], 1
    %2725 = vsyncpa %s2724, 1

</llo_original>
